<compile_context>
chip_gen: v7x
topology: tpu7x:2x2x1
jax: 0.10.0
libtpu: 0.0.40
codegen_flags: <defaults>
</compile_context>

<pallas_src>
import numpy as np
import jax
import jax.numpy as jnp
from jax import lax
from jax.experimental import pallas as pl
from jax.experimental.pallas import tpu as pltpu

_PI_180 = np.pi / 180.0
_LANE = 128


def _round_up(x, m):
    return ((x + m - 1) // m) * m


# ----------------------------------------------------------------------------
# In-kernel math helpers (only ops guaranteed to lower in Mosaic).
# ----------------------------------------------------------------------------
def _atan_cephes(x):
    """float32 arctan (Cephes atanf, ~2 ulp). Used only for the initial atan2."""
    ax = jnp.abs(x)
    big = ax > 2.414213562373095                       # tan(3*pi/8)
    mid = jnp.logical_and(jnp.logical_not(big), ax > 0.4142135623730950)
    xr = jnp.where(big, -1.0 / ax, jnp.where(mid, (ax - 1.0) / (ax + 1.0), ax))
    y0 = jnp.where(big, np.float32(np.pi / 2.0),
                   jnp.where(mid, np.float32(np.pi / 4.0), np.float32(0.0)))
    z = xr * xr
    p = 8.05374449538e-2
    p = p * z - 1.38776856032e-1
    p = p * z + 1.99777106478e-1
    p = p * z - 3.33329491539e-1
    res = y0 + p * z * xr + xr
    return jnp.where(x < 0, -res, res)


def _atan2(y, x):
    """float32 atan2 with standard quadrant handling."""
    base = _atan_cephes(y / x)
    pi = np.float32(np.pi)
    half_pi = np.float32(np.pi / 2.0)
    return jnp.where(
        x > 0, base,
        jnp.where(x < 0,
                  jnp.where(y >= 0, base + pi, base - pi),
                  jnp.where(y > 0, half_pi,
                            jnp.where(y < 0, -half_pi, np.float32(0.0)))))


def _erf_nonneg(x):
    """erf(x) for x >= 0 (Abramowitz & Stegun 7.1.26, |err| < 1.5e-7).
    The reciprocal goes to the (otherwise idle) EUP via approx=True."""
    # TODO(synk): swap for native erf if/when lax.erf gets a Pallas TPU lowering.
    t = pl.reciprocal(1.0 + 0.3275911 * x, approx=True)
    poly = t * (0.254829592 + t * (-0.284496736 + t * (1.421413741
                + t * (-1.453152027 + t * 1.061405429))))
    return 1.0 - poly * jnp.exp(-x * x)


def _piecewise_linear(x_ref, y_ref, q):
    """Linear interpolation of the sorted SMEM table (x_ref, y_ref) at q with
    linear extrapolation on the end segments (LinearInterpolator semantics)."""
    K = x_ref.shape[0]
    out = y_ref[0]
    prev_slope = None
    for k in range(K - 1):
        slope = (y_ref[k + 1] - y_ref[k]) / (x_ref[k + 1] - x_ref[k])
        if k == 0:
            out = out + slope * (q - x_ref[0])
        else:
            out = out + (slope - prev_slope) * jnp.maximum(q - x_ref[k], 0.0)
        prev_slope = slope
    return out


# ----------------------------------------------------------------------------
# The Pallas kernel.
# ----------------------------------------------------------------------------
def _make_kernel(stdev_factor, newton_iterations, newton_stepsize, max_step,
                 newton_termination_eps, newton_termination_delta_eps,
                 batch, tile_b, mask_padding):

    def kernel(vin_ref, bsp_ref, bval_ref, losp_ref, loval_ref,
               lasp_ref, laval_ref, glw_ref, out_ref, owl_ref):
        vx = vin_ref[0]          # [N, TILE_B]
        vy = vin_ref[1]
        acx = vin_ref[2]
        acy = vin_ref[3]
        n_sub = vx.shape[0]

        # speed, tangent, (left) normal  (speeds==0 -> NaN, same as torch)
        speeds = jnp.sqrt(vx * vx + vy * vy)
        tx = vx / speeds
        ty = vy / speeds
        nx = -ty
        ny = tx

        # dynamics interpolation (tables in SMEM -> scalar broadcasts)
        max_braking = _piecewise_linear(bsp_ref, bval_ref, speeds)
        max_longaccel = _piecewise_linear(losp_ref, loval_ref, speeds)
        max_lataccel = _piecewise_linear(lasp_ref, laval_ref, speeds)

        origin_y = 0.5 * (max_braking + max_longaccel)   # origin_x == 0
        long_r = max_longaccel - origin_y
        lat_r = max_lataccel
        radii_ratio = long_r / lat_r
        rr_sq = radii_ratio * radii_ratio                # hoisted out of the loop

        long_acc = acx * tx + acy * ty
        lat_acc = acx * nx + acy * ny

        # initial guess: angle of the accel offset in the ellipse frame
        thetas0 = _atan2(long_acc - origin_y, lat_acc)

        # lane-validity mask: the global "torch.all" check is over real batch
        # elements only (padded lanes compute but never gate termination).
        if mask_padding:
            lane = lax.broadcasted_iota(jnp.int32, (n_sub, tile_b), 1)
            valid = (pl.program_id(0) * tile_b + lane) < batch
        else:
            valid = None

        def masked_abs(v):
            a = jnp.abs(v)
            return jnp.where(valid, a, 0.0) if valid is not None else a

        def newton_cond(carry):
            it, _, _, done = carry
            return jnp.logical_and(it < newton_iterations, done == 0)

        def newton_body(carry):
            it, thetas, _, _ = carry
            sin_t = jnp.sin(thetas)
            cos_t = jnp.cos(thetas)
            gamma = -radii_ratio * cos_t / sin_t
            # tau = (cos(arctan(gamma)), sin(arctan(gamma)))
            #     = (1, gamma) / sqrt(1 + gamma^2)   (arctan range => cos >= 0)
            inv_hyp = lax.rsqrt(gamma * gamma + 1.0)
            tau_x = inv_hyp
            tau_y = gamma * inv_hyp
            ep_x = lat_r * cos_t
            ep_y = long_r * sin_t + origin_y
            dx = lat_acc - ep_x
            dy = long_acc - ep_y
            dotprods = dx * tau_x + dy * tau_y
            # folded: (r/sin^2) / (gamma^2+1) == r / (r^2*cos^2 + sin^2)
            dalpha_dtheta = radii_ratio / (rr_sq * cos_t * cos_t + sin_t * sin_t)
            dtau_x = -tau_y * dalpha_dtheta          # -sin(alpha) * dalpha
            dtau_y = tau_x * dalpha_dtheta           #  cos(alpha) * dalpha
            ddel_x = lat_r * sin_t
            ddel_y = -long_r * cos_t
            dotprod_deriv = 0.5 * (dx * dtau_x + ddel_x * tau_x
                                   + dy * dtau_y + ddel_y * tau_y)
            theta_deltas = newton_stepsize * (dotprods / dotprod_deriv)
            theta_deltas = jnp.minimum(jnp.maximum(theta_deltas, -max_step),
                                       max_step)
            nthetas = thetas - theta_deltas

            # break semantics: this iteration's update above IS applied; only
            # further iterations are skipped (same ordering as torch).
            stop = None
            if newton_termination_eps is not None:
                stop = jnp.max(masked_abs(dotprods)) < newton_termination_eps
            if newton_termination_delta_eps is not None:
                c = (jnp.max(masked_abs(theta_deltas))
                     < newton_termination_delta_eps)
                stop = c if stop is None else jnp.logical_or(stop, c)
            done = stop.astype(jnp.int32) if stop is not None else jnp.int32(0)
            return (it + 1, nthetas, thetas, done)

        init = (jnp.int32(0), thetas0, thetas0, jnp.int32(0))
        _, thetas, thetas_prev, _ = lax.while_loop(newton_cond, newton_body, init)

        # epilogue: rebuild tau / ellipse_points from the final thetas; the
        # torch variable `deltas` corresponds to the *pre-update* ellipse
        # points of the last executed Newton iteration (thetas_prev).
        sin_t = jnp.sin(thetas)
        cos_t = jnp.cos(thetas)
        gamma = -radii_ratio * cos_t / sin_t
        inv_hyp = lax.rsqrt(gamma * gamma + 1.0)
        tau_x = inv_hyp
        tau_y = gamma * inv_hyp
        ep_x = lat_r * cos_t
        ep_y = long_r * sin_t + origin_y

        dx = lat_acc - lat_r * jnp.cos(thetas_prev)
        dy = long_acc - (long_r * jnp.sin(thetas_prev) + origin_y)

        # outward ellipse normals, torch.sign semantics (sign(0) == 0)
        en_x = -tau_y
        en_y = tau_x
        dot_en = en_x * ep_x + en_y * (ep_y - origin_y)
        sgn = (jnp.where(dot_en > 0.0, 1.0, 0.0)
               - jnp.where(dot_en < 0.0, 1.0, 0.0))
        en_x = en_x * sgn
        en_y = en_y * sgn

        # signed distance, violation prob, Gauss-Legendre quadrature (sublanes)
        sd = dx * en_x + dy * en_y
        svp = _erf_nonneg(jnp.maximum(sd, 0.0) * stdev_factor)
        lambdas = jnp.sum(svp * glw_ref[...], axis=0, keepdims=True)  # [1, TILE_B]
        owl = jnp.exp(-lambdas)

        out_ref[0] = ep_x
        out_ref[1] = ep_y
        out_ref[2] = en_x
        out_ref[3] = en_y
        out_ref[4] = origin_y
        out_ref[5] = lat_r
        out_ref[6] = long_r
        out_ref[7] = sd
        out_ref[8] = svp
        owl_ref[...] = owl

    return kernel


# ----------------------------------------------------------------------------
# Module wrapper (parameter setup + layout plumbing are plain JAX "glue").
# ----------------------------------------------------------------------------
class ExceedLimitsProbabilityEstimator:
    def __init__(self, braking_speeds, braking_maxvals, longaccel_speeds,
                 longaccel_maxvals, lataccel_speeds, lataccel_maxvals,
                 gauss_order, dT, stdev=1.75):
        def _sorted(xs, ys):
            xs = np.asarray(xs, np.float32)
            ys = np.asarray(ys, np.float32)
            idx = np.argsort(xs)
            return jnp.asarray(xs[idx]), jnp.asarray(ys[idx])

        self.bsp, self.bval = _sorted(braking_speeds, braking_maxvals)
        self.losp, self.loval = _sorted(longaccel_speeds, longaccel_maxvals)
        self.lasp, self.laval = _sorted(lataccel_speeds, lataccel_maxvals)
        # GaussLegendre1D over [0, dT]: weighted sum over the sample axis,
        # which now lives on sublanes -> weights stored as a [N, 1] column.
        _, w = np.polynomial.legendre.leggauss(gauss_order)
        self.gl_weights = jnp.asarray(
            (0.5 * dT * w).astype(np.float32)).reshape(gauss_order, 1)
        self.gauss_order = int(gauss_order)
        self.stdev_factor = float(1.0 / (np.sqrt(2.0) * stdev))

    def __call__(self, velocities, accels, newton_iterations=20,
                 newton_stepsize=1.0, max_step=1.75 * _PI_180,
                 newton_termination_eps=1e-4,
                 newton_termination_delta_eps=0.1 * np.pi / 180.0):
        f32 = jnp.float32
        velocities = velocities.astype(f32)
        accels = accels.astype(f32)
        B, N, _ = velocities.shape
        assert N == self.gauss_order

        # Lane-dense layout: batch on lanes, gauss samples on sublanes.
        # TILE_B cap keeps ~30 live [N, TILE_B] f32 planes + double-buffered
        # packed I/O well inside v7x's 64 MiB physical / 32 MiB scoped VMEM
        # (v5e/v6e have 128 MiB and are never the binding constraint here).
        tile_b = min(_round_up(B, _LANE), 1024)
        b_pad = _round_up(B, tile_b)
        grid = (b_pad // tile_b,)

        # Pack the four input planes into one [4, N, B_pad] tensor (one DMA
        # stream); pad lanes with 1.0 so they stay finite (they are masked out
        # of the Newton termination check and sliced off afterwards).
        vin = jnp.stack([velocities[..., 0].T, velocities[..., 1].T,
                         accels[..., 0].T, accels[..., 1].T], axis=0)
        if b_pad != B:
            vin = jnp.pad(vin, ((0, 0), (0, 0), (0, b_pad - B)),
                          constant_values=1.0)

        kernel = _make_kernel(
            self.stdev_factor, int(newton_iterations), float(newton_stepsize),
            float(max_step), newton_termination_eps,
            newton_termination_delta_eps, B, tile_b, b_pad != B)

        smem = pl.BlockSpec(memory_space=pltpu.MemorySpace.SMEM)
        in_specs = ([pl.BlockSpec((4, N, tile_b), lambda i: (0, 0, i))]
                    + [smem] * 6
                    + [pl.BlockSpec((N, 1), lambda i: (0, 0))])
        out_specs = (pl.BlockSpec((9, N, tile_b), lambda i: (0, 0, i)),
                     pl.BlockSpec((1, tile_b), lambda i: (0, i)))
        out_shape = (jax.ShapeDtypeStruct((9, N, b_pad), f32),
                     jax.ShapeDtypeStruct((1, b_pad), f32))

        packed, owl = pl.pallas_call(
            kernel,
            grid=grid,
            out_shape=out_shape,
            in_specs=in_specs,
            out_specs=out_specs,
            compiler_params=pltpu.CompilerParams(
                dimension_semantics=("parallel",)),
        )(vin, self.bsp, self.bval, self.losp, self.loval, self.lasp,
          self.laval, self.gl_weights)

        packed = packed[:, :, :B]                          # [9, N, B]
        (ep_x, ep_y, en_x, en_y, oy, lat_r, long_r, sd, svp) = [
            packed[k].T for k in range(9)]                 # each [B, N]
        ellipse_points = jnp.stack([ep_x, ep_y], axis=-1)
        ellipse_normals = jnp.stack([en_x, en_y], axis=-1)
        origin = jnp.stack([jnp.zeros_like(oy), oy], axis=-1)
        overall_within_limits_probs = owl[0, :B]
        return (ellipse_points, ellipse_normals, origin, lat_r, long_r,
                sd, svp, overall_within_limits_probs)


# ----------------------------------------------------------------------------
if __name__ == "__main__":
    B = 2
    gauss_order = 8          # quadrature / time samples (sublane axis)
    dT = 2.0

    # Deterministic synthetic dynamics tables (speeds [m/s] -> max accel [m/s^2]).
    table_speeds = jnp.array([0.0, 15.0, 30.0, 45.0, 60.0, 90.0], dtype=jnp.float32)
    braking_maxvals = jnp.array([-30.0, -32.0, -34.0, -35.0, -36.0, -38.0],
                                dtype=jnp.float32)
    longaccel_maxvals = jnp.array([15.0, 14.0, 12.0, 9.0, 6.0, 3.0],
                                  dtype=jnp.float32)
    lataccel_maxvals = jnp.array([28.0, 30.0, 33.0, 36.0, 38.0, 40.0],
                                 dtype=jnp.float32)

    model = ExceedLimitsProbabilityEstimator(
        table_speeds, braking_maxvals,
        table_speeds, longaccel_maxvals,
        table_speeds, lataccel_maxvals,
        gauss_order=gauss_order, dT=dT, stdev=1.75)

    key = jax.random.PRNGKey(0)
    k1, k2, k3 = jax.random.split(key, 3)
    headings = jax.random.uniform(k1, (B, gauss_order), minval=0.0,
                                  maxval=2.0 * np.pi)
    spds = jax.random.uniform(k2, (B, gauss_order), minval=20.0, maxval=70.0)
    velocities = jnp.stack([spds * jnp.cos(headings), spds * jnp.sin(headings)],
                           axis=-1)
    accels = jax.random.uniform(k3, (B, gauss_order, 2), minval=-40.0, maxval=40.0)

    outs = model(velocities, accels)
    jax.block_until_ready(outs)
    print("KERNEL_OK")
</pallas_src>

<mosaic_0001>
module attributes {stable_mosaic.version = 11 : i64} {
  func.func @kernel(%arg0: i32, %arg1: memref<4x8x128xf32, #tpu.memory_space<vmem>>, %arg2: memref<6xf32, #tpu.memory_space<smem>>, %arg3: memref<6xf32, #tpu.memory_space<smem>>, %arg4: memref<6xf32, #tpu.memory_space<smem>>, %arg5: memref<6xf32, #tpu.memory_space<smem>>, %arg6: memref<6xf32, #tpu.memory_space<smem>>, %arg7: memref<6xf32, #tpu.memory_space<smem>>, %arg8: memref<8x1xf32, #tpu.memory_space<vmem>>, %arg9: memref<9x8x128xf32, #tpu.memory_space<vmem>>, %arg10: memref<1x128xf32, #tpu.memory_space<vmem>>) attributes {dimension_semantics = [#tpu.dimension_semantics<parallel>], iteration_bounds = array<i64: 1>, scalar_prefetch = 0 : i64, scratch_operands = 0 : i64, tpu.core_type = #tpu.core_type<tc>, window_params = [{transform_indices = @transform_0, window_bounds = array<i64: 4, 8, 128>}, {transform_indices = @transform_1, window_bounds = array<i64: 6>}, {transform_indices = @transform_2, window_bounds = array<i64: 6>}, {transform_indices = @transform_3, window_bounds = array<i64: 6>}, {transform_indices = @transform_4, window_bounds = array<i64: 6>}, {transform_indices = @transform_5, window_bounds = array<i64: 6>}, {transform_indices = @transform_6, window_bounds = array<i64: 6>}, {pipeline_mode = #tpu.pipeline_mode<synchronous>, transform_indices = @transform_7, window_bounds = array<i64: 8, 1>}, {transform_indices = @transform_8, window_bounds = array<i64: 9, 8, 128>}, {transform_indices = @transform_9, window_bounds = array<i64: 1, 128>}]} {
    %c0 = arith.constant 0 : index
    %c0_0 = arith.constant 0 : index
    %c0_1 = arith.constant 0 : index
    %0 = vector.load %arg1[%c0, %c0_0, %c0_1] : memref<4x8x128xf32, #tpu.memory_space<vmem>>, vector<1x8x128xf32>
    %1 = vector.shape_cast %0 : vector<1x8x128xf32> to vector<8x128xf32>
    %c1 = arith.constant 1 : index
    %c0_2 = arith.constant 0 : index
    %c0_3 = arith.constant 0 : index
    %2 = vector.load %arg1[%c1, %c0_2, %c0_3] : memref<4x8x128xf32, #tpu.memory_space<vmem>>, vector<1x8x128xf32>
    %3 = vector.shape_cast %2 : vector<1x8x128xf32> to vector<8x128xf32>
    %c2 = arith.constant 2 : index
    %c0_4 = arith.constant 0 : index
    %c0_5 = arith.constant 0 : index
    %4 = vector.load %arg1[%c2, %c0_4, %c0_5] : memref<4x8x128xf32, #tpu.memory_space<vmem>>, vector<1x8x128xf32>
    %5 = vector.shape_cast %4 : vector<1x8x128xf32> to vector<8x128xf32>
    %c3 = arith.constant 3 : index
    %c0_6 = arith.constant 0 : index
    %c0_7 = arith.constant 0 : index
    %6 = vector.load %arg1[%c3, %c0_6, %c0_7] : memref<4x8x128xf32, #tpu.memory_space<vmem>>, vector<1x8x128xf32>
    %7 = vector.shape_cast %6 : vector<1x8x128xf32> to vector<8x128xf32>
    %8 = arith.mulf %1, %1 : vector<8x128xf32>
    %9 = arith.mulf %3, %3 : vector<8x128xf32>
    %10 = arith.addf %8, %9 : vector<8x128xf32>
    %11 = math.sqrt %10 : vector<8x128xf32>
    %12 = arith.divf %1, %11 : vector<8x128xf32>
    %13 = arith.divf %3, %11 : vector<8x128xf32>
    %cst = arith.constant 0.000000e+00 : f32
    %14 = vector.broadcast %cst : f32 to vector<8x128xf32>
    %15 = arith.subf %14, %13 : vector<8x128xf32>
    %c0_8 = arith.constant 0 : index
    %16 = memref.load %arg3[%c0_8] : memref<6xf32, #tpu.memory_space<smem>>
    %c1_9 = arith.constant 1 : index
    %17 = memref.load %arg3[%c1_9] : memref<6xf32, #tpu.memory_space<smem>>
    %c0_10 = arith.constant 0 : index
    %18 = memref.load %arg3[%c0_10] : memref<6xf32, #tpu.memory_space<smem>>
    %19 = arith.subf %17, %18 : f32
    %c1_11 = arith.constant 1 : index
    %20 = memref.load %arg2[%c1_11] : memref<6xf32, #tpu.memory_space<smem>>
    %c0_12 = arith.constant 0 : index
    %21 = memref.load %arg2[%c0_12] : memref<6xf32, #tpu.memory_space<smem>>
    %22 = arith.subf %20, %21 : f32
    %23 = arith.divf %19, %22 : f32
    %c0_13 = arith.constant 0 : index
    %24 = memref.load %arg2[%c0_13] : memref<6xf32, #tpu.memory_space<smem>>
    %25 = vector.broadcast %24 : f32 to vector<8x128xf32>
    %26 = arith.subf %11, %25 : vector<8x128xf32>
    %27 = vector.broadcast %23 : f32 to vector<8x128xf32>
    %28 = arith.mulf %27, %26 : vector<8x128xf32>
    %29 = vector.broadcast %16 : f32 to vector<8x128xf32>
    %30 = arith.addf %29, %28 : vector<8x128xf32>
    %c2_14 = arith.constant 2 : index
    %31 = memref.load %arg3[%c2_14] : memref<6xf32, #tpu.memory_space<smem>>
    %c1_15 = arith.constant 1 : index
    %32 = memref.load %arg3[%c1_15] : memref<6xf32, #tpu.memory_space<smem>>
    %33 = arith.subf %31, %32 : f32
    %c2_16 = arith.constant 2 : index
    %34 = memref.load %arg2[%c2_16] : memref<6xf32, #tpu.memory_space<smem>>
    %c1_17 = arith.constant 1 : index
    %35 = memref.load %arg2[%c1_17] : memref<6xf32, #tpu.memory_space<smem>>
    %36 = arith.subf %34, %35 : f32
    %37 = arith.divf %33, %36 : f32
    %38 = arith.subf %37, %23 : f32
    %c1_18 = arith.constant 1 : index
    %39 = memref.load %arg2[%c1_18] : memref<6xf32, #tpu.memory_space<smem>>
    %40 = vector.broadcast %39 : f32 to vector<8x128xf32>
    %41 = arith.subf %11, %40 : vector<8x128xf32>
    %cst_19 = arith.constant 0.000000e+00 : f32
    %42 = vector.broadcast %cst_19 : f32 to vector<8x128xf32>
    %43 = arith.maximumf %41, %42 : vector<8x128xf32>
    %44 = vector.broadcast %38 : f32 to vector<8x128xf32>
    %45 = arith.mulf %44, %43 : vector<8x128xf32>
    %46 = arith.addf %30, %45 : vector<8x128xf32>
    %c3_20 = arith.constant 3 : index
    %47 = memref.load %arg3[%c3_20] : memref<6xf32, #tpu.memory_space<smem>>
    %c2_21 = arith.constant 2 : index
    %48 = memref.load %arg3[%c2_21] : memref<6xf32, #tpu.memory_space<smem>>
    %49 = arith.subf %47, %48 : f32
    %c3_22 = arith.constant 3 : index
    %50 = memref.load %arg2[%c3_22] : memref<6xf32, #tpu.memory_space<smem>>
    %c2_23 = arith.constant 2 : index
    %51 = memref.load %arg2[%c2_23] : memref<6xf32, #tpu.memory_space<smem>>
    %52 = arith.subf %50, %51 : f32
    %53 = arith.divf %49, %52 : f32
    %54 = arith.subf %53, %37 : f32
    %c2_24 = arith.constant 2 : index
    %55 = memref.load %arg2[%c2_24] : memref<6xf32, #tpu.memory_space<smem>>
    %56 = vector.broadcast %55 : f32 to vector<8x128xf32>
    %57 = arith.subf %11, %56 : vector<8x128xf32>
    %cst_25 = arith.constant 0.000000e+00 : f32
    %58 = vector.broadcast %cst_25 : f32 to vector<8x128xf32>
    %59 = arith.maximumf %57, %58 : vector<8x128xf32>
    %60 = vector.broadcast %54 : f32 to vector<8x128xf32>
    %61 = arith.mulf %60, %59 : vector<8x128xf32>
    %62 = arith.addf %46, %61 : vector<8x128xf32>
    %c4 = arith.constant 4 : index
    %63 = memref.load %arg3[%c4] : memref<6xf32, #tpu.memory_space<smem>>
    %c3_26 = arith.constant 3 : index
    %64 = memref.load %arg3[%c3_26] : memref<6xf32, #tpu.memory_space<smem>>
    %65 = arith.subf %63, %64 : f32
    %c4_27 = arith.constant 4 : index
    %66 = memref.load %arg2[%c4_27] : memref<6xf32, #tpu.memory_space<smem>>
    %c3_28 = arith.constant 3 : index
    %67 = memref.load %arg2[%c3_28] : memref<6xf32, #tpu.memory_space<smem>>
    %68 = arith.subf %66, %67 : f32
    %69 = arith.divf %65, %68 : f32
    %70 = arith.subf %69, %53 : f32
    %c3_29 = arith.constant 3 : index
    %71 = memref.load %arg2[%c3_29] : memref<6xf32, #tpu.memory_space<smem>>
    %72 = vector.broadcast %71 : f32 to vector<8x128xf32>
    %73 = arith.subf %11, %72 : vector<8x128xf32>
    %cst_30 = arith.constant 0.000000e+00 : f32
    %74 = vector.broadcast %cst_30 : f32 to vector<8x128xf32>
    %75 = arith.maximumf %73, %74 : vector<8x128xf32>
    %76 = vector.broadcast %70 : f32 to vector<8x128xf32>
    %77 = arith.mulf %76, %75 : vector<8x128xf32>
    %78 = arith.addf %62, %77 : vector<8x128xf32>
    %c5 = arith.constant 5 : index
    %79 = memref.load %arg3[%c5] : memref<6xf32, #tpu.memory_space<smem>>
    %c4_31 = arith.constant 4 : index
    %80 = memref.load %arg3[%c4_31] : memref<6xf32, #tpu.memory_space<smem>>
    %81 = arith.subf %79, %80 : f32
    %c5_32 = arith.constant 5 : index
    %82 = memref.load %arg2[%c5_32] : memref<6xf32, #tpu.memory_space<smem>>
    %c4_33 = arith.constant 4 : index
    %83 = memref.load %arg2[%c4_33] : memref<6xf32, #tpu.memory_space<smem>>
    %84 = arith.subf %82, %83 : f32
    %85 = arith.divf %81, %84 : f32
    %86 = arith.subf %85, %69 : f32
    %c4_34 = arith.constant 4 : index
    %87 = memref.load %arg2[%c4_34] : memref<6xf32, #tpu.memory_space<smem>>
    %88 = vector.broadcast %87 : f32 to vector<8x128xf32>
    %89 = arith.subf %11, %88 : vector<8x128xf32>
    %cst_35 = arith.constant 0.000000e+00 : f32
    %90 = vector.broadcast %cst_35 : f32 to vector<8x128xf32>
    %91 = arith.maximumf %89, %90 : vector<8x128xf32>
    %92 = vector.broadcast %86 : f32 to vector<8x128xf32>
    %93 = arith.mulf %92, %91 : vector<8x128xf32>
    %94 = arith.addf %78, %93 : vector<8x128xf32>
    %c0_36 = arith.constant 0 : index
    %95 = memref.load %arg5[%c0_36] : memref<6xf32, #tpu.memory_space<smem>>
    %c1_37 = arith.constant 1 : index
    %96 = memref.load %arg5[%c1_37] : memref<6xf32, #tpu.memory_space<smem>>
    %c0_38 = arith.constant 0 : index
    %97 = memref.load %arg5[%c0_38] : memref<6xf32, #tpu.memory_space<smem>>
    %98 = arith.subf %96, %97 : f32
    %c1_39 = arith.constant 1 : index
    %99 = memref.load %arg4[%c1_39] : memref<6xf32, #tpu.memory_space<smem>>
    %c0_40 = arith.constant 0 : index
    %100 = memref.load %arg4[%c0_40] : memref<6xf32, #tpu.memory_space<smem>>
    %101 = arith.subf %99, %100 : f32
    %102 = arith.divf %98, %101 : f32
    %c0_41 = arith.constant 0 : index
    %103 = memref.load %arg4[%c0_41] : memref<6xf32, #tpu.memory_space<smem>>
    %104 = vector.broadcast %103 : f32 to vector<8x128xf32>
    %105 = arith.subf %11, %104 : vector<8x128xf32>
    %106 = vector.broadcast %102 : f32 to vector<8x128xf32>
    %107 = arith.mulf %106, %105 : vector<8x128xf32>
    %108 = vector.broadcast %95 : f32 to vector<8x128xf32>
    %109 = arith.addf %108, %107 : vector<8x128xf32>
    %c2_42 = arith.constant 2 : index
    %110 = memref.load %arg5[%c2_42] : memref<6xf32, #tpu.memory_space<smem>>
    %c1_43 = arith.constant 1 : index
    %111 = memref.load %arg5[%c1_43] : memref<6xf32, #tpu.memory_space<smem>>
    %112 = arith.subf %110, %111 : f32
    %c2_44 = arith.constant 2 : index
    %113 = memref.load %arg4[%c2_44] : memref<6xf32, #tpu.memory_space<smem>>
    %c1_45 = arith.constant 1 : index
    %114 = memref.load %arg4[%c1_45] : memref<6xf32, #tpu.memory_space<smem>>
    %115 = arith.subf %113, %114 : f32
    %116 = arith.divf %112, %115 : f32
    %117 = arith.subf %116, %102 : f32
    %c1_46 = arith.constant 1 : index
    %118 = memref.load %arg4[%c1_46] : memref<6xf32, #tpu.memory_space<smem>>
    %119 = vector.broadcast %118 : f32 to vector<8x128xf32>
    %120 = arith.subf %11, %119 : vector<8x128xf32>
    %cst_47 = arith.constant 0.000000e+00 : f32
    %121 = vector.broadcast %cst_47 : f32 to vector<8x128xf32>
    %122 = arith.maximumf %120, %121 : vector<8x128xf32>
    %123 = vector.broadcast %117 : f32 to vector<8x128xf32>
    %124 = arith.mulf %123, %122 : vector<8x128xf32>
    %125 = arith.addf %109, %124 : vector<8x128xf32>
    %c3_48 = arith.constant 3 : index
    %126 = memref.load %arg5[%c3_48] : memref<6xf32, #tpu.memory_space<smem>>
    %c2_49 = arith.constant 2 : index
    %127 = memref.load %arg5[%c2_49] : memref<6xf32, #tpu.memory_space<smem>>
    %128 = arith.subf %126, %127 : f32
    %c3_50 = arith.constant 3 : index
    %129 = memref.load %arg4[%c3_50] : memref<6xf32, #tpu.memory_space<smem>>
    %c2_51 = arith.constant 2 : index
    %130 = memref.load %arg4[%c2_51] : memref<6xf32, #tpu.memory_space<smem>>
    %131 = arith.subf %129, %130 : f32
    %132 = arith.divf %128, %131 : f32
    %133 = arith.subf %132, %116 : f32
    %c2_52 = arith.constant 2 : index
    %134 = memref.load %arg4[%c2_52] : memref<6xf32, #tpu.memory_space<smem>>
    %135 = vector.broadcast %134 : f32 to vector<8x128xf32>
    %136 = arith.subf %11, %135 : vector<8x128xf32>
    %cst_53 = arith.constant 0.000000e+00 : f32
    %137 = vector.broadcast %cst_53 : f32 to vector<8x128xf32>
    %138 = arith.maximumf %136, %137 : vector<8x128xf32>
    %139 = vector.broadcast %133 : f32 to vector<8x128xf32>
    %140 = arith.mulf %139, %138 : vector<8x128xf32>
    %141 = arith.addf %125, %140 : vector<8x128xf32>
    %c4_54 = arith.constant 4 : index
    %142 = memref.load %arg5[%c4_54] : memref<6xf32, #tpu.memory_space<smem>>
    %c3_55 = arith.constant 3 : index
    %143 = memref.load %arg5[%c3_55] : memref<6xf32, #tpu.memory_space<smem>>
    %144 = arith.subf %142, %143 : f32
    %c4_56 = arith.constant 4 : index
    %145 = memref.load %arg4[%c4_56] : memref<6xf32, #tpu.memory_space<smem>>
    %c3_57 = arith.constant 3 : index
    %146 = memref.load %arg4[%c3_57] : memref<6xf32, #tpu.memory_space<smem>>
    %147 = arith.subf %145, %146 : f32
    %148 = arith.divf %144, %147 : f32
    %149 = arith.subf %148, %132 : f32
    %c3_58 = arith.constant 3 : index
    %150 = memref.load %arg4[%c3_58] : memref<6xf32, #tpu.memory_space<smem>>
    %151 = vector.broadcast %150 : f32 to vector<8x128xf32>
    %152 = arith.subf %11, %151 : vector<8x128xf32>
    %cst_59 = arith.constant 0.000000e+00 : f32
    %153 = vector.broadcast %cst_59 : f32 to vector<8x128xf32>
    %154 = arith.maximumf %152, %153 : vector<8x128xf32>
    %155 = vector.broadcast %149 : f32 to vector<8x128xf32>
    %156 = arith.mulf %155, %154 : vector<8x128xf32>
    %157 = arith.addf %141, %156 : vector<8x128xf32>
    %c5_60 = arith.constant 5 : index
    %158 = memref.load %arg5[%c5_60] : memref<6xf32, #tpu.memory_space<smem>>
    %c4_61 = arith.constant 4 : index
    %159 = memref.load %arg5[%c4_61] : memref<6xf32, #tpu.memory_space<smem>>
    %160 = arith.subf %158, %159 : f32
    %c5_62 = arith.constant 5 : index
    %161 = memref.load %arg4[%c5_62] : memref<6xf32, #tpu.memory_space<smem>>
    %c4_63 = arith.constant 4 : index
    %162 = memref.load %arg4[%c4_63] : memref<6xf32, #tpu.memory_space<smem>>
    %163 = arith.subf %161, %162 : f32
    %164 = arith.divf %160, %163 : f32
    %165 = arith.subf %164, %148 : f32
    %c4_64 = arith.constant 4 : index
    %166 = memref.load %arg4[%c4_64] : memref<6xf32, #tpu.memory_space<smem>>
    %167 = vector.broadcast %166 : f32 to vector<8x128xf32>
    %168 = arith.subf %11, %167 : vector<8x128xf32>
    %cst_65 = arith.constant 0.000000e+00 : f32
    %169 = vector.broadcast %cst_65 : f32 to vector<8x128xf32>
    %170 = arith.maximumf %168, %169 : vector<8x128xf32>
    %171 = vector.broadcast %165 : f32 to vector<8x128xf32>
    %172 = arith.mulf %171, %170 : vector<8x128xf32>
    %173 = arith.addf %157, %172 : vector<8x128xf32>
    %c0_66 = arith.constant 0 : index
    %174 = memref.load %arg7[%c0_66] : memref<6xf32, #tpu.memory_space<smem>>
    %c1_67 = arith.constant 1 : index
    %175 = memref.load %arg7[%c1_67] : memref<6xf32, #tpu.memory_space<smem>>
    %c0_68 = arith.constant 0 : index
    %176 = memref.load %arg7[%c0_68] : memref<6xf32, #tpu.memory_space<smem>>
    %177 = arith.subf %175, %176 : f32
    %c1_69 = arith.constant 1 : index
    %178 = memref.load %arg6[%c1_69] : memref<6xf32, #tpu.memory_space<smem>>
    %c0_70 = arith.constant 0 : index
    %179 = memref.load %arg6[%c0_70] : memref<6xf32, #tpu.memory_space<smem>>
    %180 = arith.subf %178, %179 : f32
    %181 = arith.divf %177, %180 : f32
    %c0_71 = arith.constant 0 : index
    %182 = memref.load %arg6[%c0_71] : memref<6xf32, #tpu.memory_space<smem>>
    %183 = vector.broadcast %182 : f32 to vector<8x128xf32>
    %184 = arith.subf %11, %183 : vector<8x128xf32>
    %185 = vector.broadcast %181 : f32 to vector<8x128xf32>
    %186 = arith.mulf %185, %184 : vector<8x128xf32>
    %187 = vector.broadcast %174 : f32 to vector<8x128xf32>
    %188 = arith.addf %187, %186 : vector<8x128xf32>
    %c2_72 = arith.constant 2 : index
    %189 = memref.load %arg7[%c2_72] : memref<6xf32, #tpu.memory_space<smem>>
    %c1_73 = arith.constant 1 : index
    %190 = memref.load %arg7[%c1_73] : memref<6xf32, #tpu.memory_space<smem>>
    %191 = arith.subf %189, %190 : f32
    %c2_74 = arith.constant 2 : index
    %192 = memref.load %arg6[%c2_74] : memref<6xf32, #tpu.memory_space<smem>>
    %c1_75 = arith.constant 1 : index
    %193 = memref.load %arg6[%c1_75] : memref<6xf32, #tpu.memory_space<smem>>
    %194 = arith.subf %192, %193 : f32
    %195 = arith.divf %191, %194 : f32
    %196 = arith.subf %195, %181 : f32
    %c1_76 = arith.constant 1 : index
    %197 = memref.load %arg6[%c1_76] : memref<6xf32, #tpu.memory_space<smem>>
    %198 = vector.broadcast %197 : f32 to vector<8x128xf32>
    %199 = arith.subf %11, %198 : vector<8x128xf32>
    %cst_77 = arith.constant 0.000000e+00 : f32
    %200 = vector.broadcast %cst_77 : f32 to vector<8x128xf32>
    %201 = arith.maximumf %199, %200 : vector<8x128xf32>
    %202 = vector.broadcast %196 : f32 to vector<8x128xf32>
    %203 = arith.mulf %202, %201 : vector<8x128xf32>
    %204 = arith.addf %188, %203 : vector<8x128xf32>
    %c3_78 = arith.constant 3 : index
    %205 = memref.load %arg7[%c3_78] : memref<6xf32, #tpu.memory_space<smem>>
    %c2_79 = arith.constant 2 : index
    %206 = memref.load %arg7[%c2_79] : memref<6xf32, #tpu.memory_space<smem>>
    %207 = arith.subf %205, %206 : f32
    %c3_80 = arith.constant 3 : index
    %208 = memref.load %arg6[%c3_80] : memref<6xf32, #tpu.memory_space<smem>>
    %c2_81 = arith.constant 2 : index
    %209 = memref.load %arg6[%c2_81] : memref<6xf32, #tpu.memory_space<smem>>
    %210 = arith.subf %208, %209 : f32
    %211 = arith.divf %207, %210 : f32
    %212 = arith.subf %211, %195 : f32
    %c2_82 = arith.constant 2 : index
    %213 = memref.load %arg6[%c2_82] : memref<6xf32, #tpu.memory_space<smem>>
    %214 = vector.broadcast %213 : f32 to vector<8x128xf32>
    %215 = arith.subf %11, %214 : vector<8x128xf32>
    %cst_83 = arith.constant 0.000000e+00 : f32
    %216 = vector.broadcast %cst_83 : f32 to vector<8x128xf32>
    %217 = arith.maximumf %215, %216 : vector<8x128xf32>
    %218 = vector.broadcast %212 : f32 to vector<8x128xf32>
    %219 = arith.mulf %218, %217 : vector<8x128xf32>
    %220 = arith.addf %204, %219 : vector<8x128xf32>
    %c4_84 = arith.constant 4 : index
    %221 = memref.load %arg7[%c4_84] : memref<6xf32, #tpu.memory_space<smem>>
    %c3_85 = arith.constant 3 : index
    %222 = memref.load %arg7[%c3_85] : memref<6xf32, #tpu.memory_space<smem>>
    %223 = arith.subf %221, %222 : f32
    %c4_86 = arith.constant 4 : index
    %224 = memref.load %arg6[%c4_86] : memref<6xf32, #tpu.memory_space<smem>>
    %c3_87 = arith.constant 3 : index
    %225 = memref.load %arg6[%c3_87] : memref<6xf32, #tpu.memory_space<smem>>
    %226 = arith.subf %224, %225 : f32
    %227 = arith.divf %223, %226 : f32
    %228 = arith.subf %227, %211 : f32
    %c3_88 = arith.constant 3 : index
    %229 = memref.load %arg6[%c3_88] : memref<6xf32, #tpu.memory_space<smem>>
    %230 = vector.broadcast %229 : f32 to vector<8x128xf32>
    %231 = arith.subf %11, %230 : vector<8x128xf32>
    %cst_89 = arith.constant 0.000000e+00 : f32
    %232 = vector.broadcast %cst_89 : f32 to vector<8x128xf32>
    %233 = arith.maximumf %231, %232 : vector<8x128xf32>
    %234 = vector.broadcast %228 : f32 to vector<8x128xf32>
    %235 = arith.mulf %234, %233 : vector<8x128xf32>
    %236 = arith.addf %220, %235 : vector<8x128xf32>
    %c5_90 = arith.constant 5 : index
    %237 = memref.load %arg7[%c5_90] : memref<6xf32, #tpu.memory_space<smem>>
    %c4_91 = arith.constant 4 : index
    %238 = memref.load %arg7[%c4_91] : memref<6xf32, #tpu.memory_space<smem>>
    %239 = arith.subf %237, %238 : f32
    %c5_92 = arith.constant 5 : index
    %240 = memref.load %arg6[%c5_92] : memref<6xf32, #tpu.memory_space<smem>>
    %c4_93 = arith.constant 4 : index
    %241 = memref.load %arg6[%c4_93] : memref<6xf32, #tpu.memory_space<smem>>
    %242 = arith.subf %240, %241 : f32
    %243 = arith.divf %239, %242 : f32
    %244 = arith.subf %243, %227 : f32
    %c4_94 = arith.constant 4 : index
    %245 = memref.load %arg6[%c4_94] : memref<6xf32, #tpu.memory_space<smem>>
    %246 = vector.broadcast %245 : f32 to vector<8x128xf32>
    %247 = arith.subf %11, %246 : vector<8x128xf32>
    %cst_95 = arith.constant 0.000000e+00 : f32
    %248 = vector.broadcast %cst_95 : f32 to vector<8x128xf32>
    %249 = arith.maximumf %247, %248 : vector<8x128xf32>
    %250 = vector.broadcast %244 : f32 to vector<8x128xf32>
    %251 = arith.mulf %250, %249 : vector<8x128xf32>
    %252 = arith.addf %236, %251 : vector<8x128xf32>
    %253 = arith.addf %94, %173 : vector<8x128xf32>
    %cst_96 = arith.constant 5.000000e-01 : f32
    %254 = vector.broadcast %cst_96 : f32 to vector<8x128xf32>
    %255 = arith.mulf %254, %253 : vector<8x128xf32>
    %256 = arith.subf %173, %255 : vector<8x128xf32>
    %257 = arith.divf %256, %252 : vector<8x128xf32>
    %258 = arith.mulf %257, %257 : vector<8x128xf32>
    %259 = arith.mulf %5, %12 : vector<8x128xf32>
    %260 = arith.mulf %7, %13 : vector<8x128xf32>
    %261 = arith.addf %259, %260 : vector<8x128xf32>
    %262 = arith.mulf %5, %15 : vector<8x128xf32>
    %263 = arith.mulf %7, %12 : vector<8x128xf32>
    %264 = arith.addf %262, %263 : vector<8x128xf32>
    %265 = arith.subf %261, %255 : vector<8x128xf32>
    %266 = arith.divf %265, %264 : vector<8x128xf32>
    %267 = math.absf %266 : vector<8x128xf32>
    %cst_97 = arith.constant 2.41421366 : f32
    %268 = vector.broadcast %cst_97 : f32 to vector<8x128xf32>
    %269 = arith.cmpf ogt, %267, %268 : vector<8x128xf32>
    %cst_98 = arith.constant dense<true> : vector<8x128xi1>
    %270 = arith.xori %269, %cst_98 : vector<8x128xi1>
    %cst_99 = arith.constant 0.414213568 : f32
    %271 = vector.broadcast %cst_99 : f32 to vector<8x128xf32>
    %272 = arith.cmpf ogt, %267, %271 : vector<8x128xf32>
    %273 = arith.andi %270, %272 : vector<8x128xi1>
    %cst_100 = arith.constant -1.000000e+00 : f32
    %274 = vector.broadcast %cst_100 : f32 to vector<8x128xf32>
    %275 = arith.divf %274, %267 : vector<8x128xf32>
    %cst_101 = arith.constant 1.000000e+00 : f32
    %276 = vector.broadcast %cst_101 : f32 to vector<8x128xf32>
    %277 = arith.subf %267, %276 : vector<8x128xf32>
    %cst_102 = arith.constant 1.000000e+00 : f32
    %278 = vector.broadcast %cst_102 : f32 to vector<8x128xf32>
    %279 = arith.addf %267, %278 : vector<8x128xf32>
    %280 = arith.divf %277, %279 : vector<8x128xf32>
    %281 = arith.select %273, %280, %267 : vector<8x128xi1>, vector<8x128xf32>
    %282 = arith.select %269, %275, %281 : vector<8x128xi1>, vector<8x128xf32>
    %cst_103 = arith.constant 0.785398185 : f32
    %cst_104 = arith.constant 0.000000e+00 : f32
    %283 = vector.broadcast %cst_103 : f32 to vector<8x128xf32>
    %284 = vector.broadcast %cst_104 : f32 to vector<8x128xf32>
    %285 = arith.select %273, %283, %284 : vector<8x128xi1>, vector<8x128xf32>
    %cst_105 = arith.constant 1.57079637 : f32
    %286 = vector.broadcast %cst_105 : f32 to vector<8x128xf32>
    %287 = arith.select %269, %286, %285 : vector<8x128xi1>, vector<8x128xf32>
    %288 = arith.mulf %282, %282 : vector<8x128xf32>
    %cst_106 = arith.constant 0.0805374458 : f32
    %289 = vector.broadcast %cst_106 : f32 to vector<8x128xf32>
    %290 = arith.mulf %289, %288 : vector<8x128xf32>
    %cst_107 = arith.constant 0.138776854 : f32
    %291 = vector.broadcast %cst_107 : f32 to vector<8x128xf32>
    %292 = arith.subf %290, %291 : vector<8x128xf32>
    %293 = arith.mulf %292, %288 : vector<8x128xf32>
    %cst_108 = arith.constant 0.199777111 : f32
    %294 = vector.broadcast %cst_108 : f32 to vector<8x128xf32>
    %295 = arith.addf %293, %294 : vector<8x128xf32>
    %296 = arith.mulf %295, %288 : vector<8x128xf32>
    %cst_109 = arith.constant 0.333329499 : f32
    %297 = vector.broadcast %cst_109 : f32 to vector<8x128xf32>
    %298 = arith.subf %296, %297 : vector<8x128xf32>
    %299 = arith.mulf %298, %288 : vector<8x128xf32>
    %300 = arith.mulf %299, %282 : vector<8x128xf32>
    %301 = arith.addf %287, %300 : vector<8x128xf32>
    %302 = arith.addf %301, %282 : vector<8x128xf32>
    %cst_110 = arith.constant 0.000000e+00 : f32
    %303 = vector.broadcast %cst_110 : f32 to vector<8x128xf32>
    %304 = arith.cmpf olt, %266, %303 : vector<8x128xf32>
    %cst_111 = arith.constant 0.000000e+00 : f32
    %305 = vector.broadcast %cst_111 : f32 to vector<8x128xf32>
    %306 = arith.subf %305, %302 : vector<8x128xf32>
    %307 = arith.select %304, %306, %302 : vector<8x128xi1>, vector<8x128xf32>
    %cst_112 = arith.constant 0.000000e+00 : f32
    %308 = vector.broadcast %cst_112 : f32 to vector<8x128xf32>
    %309 = arith.cmpf ogt, %264, %308 : vector<8x128xf32>
    %cst_113 = arith.constant 0.000000e+00 : f32
    %310 = vector.broadcast %cst_113 : f32 to vector<8x128xf32>
    %311 = arith.cmpf olt, %264, %310 : vector<8x128xf32>
    %cst_114 = arith.constant 0.000000e+00 : f32
    %312 = vector.broadcast %cst_114 : f32 to vector<8x128xf32>
    %313 = arith.cmpf oge, %265, %312 : vector<8x128xf32>
    %cst_115 = arith.constant 3.14159274 : f32
    %314 = vector.broadcast %cst_115 : f32 to vector<8x128xf32>
    %315 = arith.addf %307, %314 : vector<8x128xf32>
    %cst_116 = arith.constant 3.14159274 : f32
    %316 = vector.broadcast %cst_116 : f32 to vector<8x128xf32>
    %317 = arith.subf %307, %316 : vector<8x128xf32>
    %318 = arith.select %313, %315, %317 : vector<8x128xi1>, vector<8x128xf32>
    %cst_117 = arith.constant 0.000000e+00 : f32
    %319 = vector.broadcast %cst_117 : f32 to vector<8x128xf32>
    %320 = arith.cmpf ogt, %265, %319 : vector<8x128xf32>
    %cst_118 = arith.constant 0.000000e+00 : f32
    %321 = vector.broadcast %cst_118 : f32 to vector<8x128xf32>
    %322 = arith.cmpf olt, %265, %321 : vector<8x128xf32>
    %cst_119 = arith.constant -1.57079637 : f32
    %cst_120 = arith.constant 0.000000e+00 : f32
    %323 = vector.broadcast %cst_119 : f32 to vector<8x128xf32>
    %324 = vector.broadcast %cst_120 : f32 to vector<8x128xf32>
    %325 = arith.select %322, %323, %324 : vector<8x128xi1>, vector<8x128xf32>
    %cst_121 = arith.constant 1.57079637 : f32
    %326 = vector.broadcast %cst_121 : f32 to vector<8x128xf32>
    %327 = arith.select %320, %326, %325 : vector<8x128xi1>, vector<8x128xf32>
    %328 = arith.select %311, %318, %327 : vector<8x128xi1>, vector<8x128xf32>
    %329 = arith.select %309, %307, %328 : vector<8x128xi1>, vector<8x128xf32>
    %330 = tpu.iota {dimensions = array<i32: 1>} : vector<8x128xi32>
    %c128_i32 = arith.constant 128 : i32
    %331 = arith.muli %arg0, %c128_i32 : i32
    %332 = vector.broadcast %331 : i32 to vector<8x128xi32>
    %333 = arith.addi %332, %330 : vector<8x128xi32>
    %c2_i32 = arith.constant 2 : i32
    %334 = vector.broadcast %c2_i32 : i32 to vector<8x128xi32>
    %335 = arith.cmpi slt, %333, %334 : vector<8x128xi32>
    %c0_i32 = arith.constant 0 : i32
    %c0_i32_122 = arith.constant 0 : i32
    %336:4 = scf.while (%arg11 = %c0_i32, %arg12 = %329, %arg13 = %329, %arg14 = %c0_i32_122) : (i32, vector<8x128xf32>, vector<8x128xf32>, i32) -> (i32, vector<8x128xf32>, vector<8x128xf32>, i32) {
      %c20_i32 = arith.constant 20 : i32
      %446 = arith.cmpi slt, %arg11, %c20_i32 : i32
      %c0_i32_173 = arith.constant 0 : i32
      %447 = arith.cmpi eq, %arg14, %c0_i32_173 : i32
      %448 = arith.andi %446, %447 : i1
      scf.condition(%448) %arg11, %arg12, %arg13, %arg14 : i32, vector<8x128xf32>, vector<8x128xf32>, i32
    } do {
    ^bb0(%arg11: i32, %arg12: vector<8x128xf32>, %arg13: vector<8x128xf32>, %arg14: i32):
      %446 = math.sin %arg12 : vector<8x128xf32>
      %447 = math.cos %arg12 : vector<8x128xf32>
      %cst_173 = arith.constant 0.000000e+00 : f32
      %448 = vector.broadcast %cst_173 : f32 to vector<8x128xf32>
      %449 = arith.subf %448, %257 : vector<8x128xf32>
      %450 = arith.mulf %449, %447 : vector<8x128xf32>
      %451 = arith.divf %450, %446 : vector<8x128xf32>
      %452 = arith.mulf %451, %451 : vector<8x128xf32>
      %cst_174 = arith.constant 1.000000e+00 : f32
      %453 = vector.broadcast %cst_174 : f32 to vector<8x128xf32>
      %454 = arith.addf %452, %453 : vector<8x128xf32>
      %455 = math.rsqrt %454 : vector<8x128xf32>
      %456 = arith.mulf %451, %455 : vector<8x128xf32>
      %457 = arith.mulf %252, %447 : vector<8x128xf32>
      %458 = arith.mulf %256, %446 : vector<8x128xf32>
      %459 = arith.addf %458, %255 : vector<8x128xf32>
      %460 = arith.subf %264, %457 : vector<8x128xf32>
      %461 = arith.subf %261, %459 : vector<8x128xf32>
      %462 = arith.mulf %460, %455 : vector<8x128xf32>
      %463 = arith.mulf %461, %456 : vector<8x128xf32>
      %464 = arith.addf %462, %463 : vector<8x128xf32>
      %465 = arith.mulf %258, %447 : vector<8x128xf32>
      %466 = arith.mulf %465, %447 : vector<8x128xf32>
      %467 = arith.mulf %446, %446 : vector<8x128xf32>
      %468 = arith.addf %466, %467 : vector<8x128xf32>
      %469 = arith.divf %257, %468 : vector<8x128xf32>
      %cst_175 = arith.constant 0.000000e+00 : f32
      %470 = vector.broadcast %cst_175 : f32 to vector<8x128xf32>
      %471 = arith.subf %470, %456 : vector<8x128xf32>
      %472 = arith.mulf %471, %469 : vector<8x128xf32>
      %473 = arith.mulf %455, %469 : vector<8x128xf32>
      %474 = arith.mulf %252, %446 : vector<8x128xf32>
      %cst_176 = arith.constant 0.000000e+00 : f32
      %475 = vector.broadcast %cst_176 : f32 to vector<8x128xf32>
      %476 = arith.subf %475, %256 : vector<8x128xf32>
      %477 = arith.mulf %476, %447 : vector<8x128xf32>
      %478 = arith.mulf %460, %472 : vector<8x128xf32>
      %479 = arith.mulf %474, %455 : vector<8x128xf32>
      %480 = arith.addf %478, %479 : vector<8x128xf32>
      %481 = arith.mulf %461, %473 : vector<8x128xf32>
      %482 = arith.addf %480, %481 : vector<8x128xf32>
      %483 = arith.mulf %477, %456 : vector<8x128xf32>
      %484 = arith.addf %482, %483 : vector<8x128xf32>
      %cst_177 = arith.constant 5.000000e-01 : f32
      %485 = vector.broadcast %cst_177 : f32 to vector<8x128xf32>
      %486 = arith.mulf %485, %484 : vector<8x128xf32>
      %487 = arith.divf %464, %486 : vector<8x128xf32>
      %cst_178 = arith.constant 1.000000e+00 : f32
      %488 = vector.broadcast %cst_178 : f32 to vector<8x128xf32>
      %489 = arith.mulf %488, %487 : vector<8x128xf32>
      %cst_179 = arith.constant -0.0305432621 : f32
      %490 = vector.broadcast %cst_179 : f32 to vector<8x128xf32>
      %491 = arith.maximumf %489, %490 : vector<8x128xf32>
      %cst_180 = arith.constant 0.0305432621 : f32
      %492 = vector.broadcast %cst_180 : f32 to vector<8x128xf32>
      %493 = arith.minimumf %491, %492 : vector<8x128xf32>
      %494 = arith.subf %arg12, %493 : vector<8x128xf32>
      %495 = math.absf %464 : vector<8x128xf32>
      %cst_181 = arith.constant 0.000000e+00 : f32
      %496 = vector.broadcast %cst_181 : f32 to vector<8x128xf32>
      %497 = arith.select %335, %495, %496 : vector<8x128xi1>, vector<8x128xf32>
      %498 = vector.shape_cast %497 : vector<8x128xf32> to vector<1x8x128xf32>
      %cst_182 = arith.constant dense<0xFF800000> : vector<1xf32>
      %499 = vector.multi_reduction <maximumf>, %498, %cst_182 [1, 2] : vector<1x8x128xf32> to vector<1xf32>
      %500 = vector.shape_cast %499 : vector<1xf32> to vector<1x1x1xf32>
      %501 = vector.extract %500[0, 0, 0] : f32 from vector<1x1x1xf32>
      %cst_183 = arith.constant 9.99999974E-5 : f32
      %502 = arith.cmpf olt, %501, %cst_183 : f32
      %503 = math.absf %493 : vector<8x128xf32>
      %cst_184 = arith.constant 0.000000e+00 : f32
      %504 = vector.broadcast %cst_184 : f32 to vector<8x128xf32>
      %505 = arith.select %335, %503, %504 : vector<8x128xi1>, vector<8x128xf32>
      %506 = vector.shape_cast %505 : vector<8x128xf32> to vector<1x8x128xf32>
      %cst_185 = arith.constant dense<0xFF800000> : vector<1xf32>
      %507 = vector.multi_reduction <maximumf>, %506, %cst_185 [1, 2] : vector<1x8x128xf32> to vector<1xf32>
      %508 = vector.shape_cast %507 : vector<1xf32> to vector<1x1x1xf32>
      %509 = vector.extract %508[0, 0, 0] : f32 from vector<1x1x1xf32>
      %cst_186 = arith.constant 0.00174532924 : f32
      %510 = arith.cmpf olt, %509, %cst_186 : f32
      %511 = arith.ori %502, %510 : i1
      %512 = arith.extui %511 : i1 to i32
      %c1_i32 = arith.constant 1 : i32
      %513 = arith.addi %arg11, %c1_i32 : i32
      scf.yield %513, %494, %arg12, %512 : i32, vector<8x128xf32>, vector<8x128xf32>, i32
    }
    %337 = math.sin %336#1 : vector<8x128xf32>
    %338 = math.cos %336#1 : vector<8x128xf32>
    %cst_123 = arith.constant 0.000000e+00 : f32
    %339 = vector.broadcast %cst_123 : f32 to vector<8x128xf32>
    %340 = arith.subf %339, %257 : vector<8x128xf32>
    %341 = arith.mulf %340, %338 : vector<8x128xf32>
    %342 = arith.divf %341, %337 : vector<8x128xf32>
    %343 = arith.mulf %342, %342 : vector<8x128xf32>
    %cst_124 = arith.constant 1.000000e+00 : f32
    %344 = vector.broadcast %cst_124 : f32 to vector<8x128xf32>
    %345 = arith.addf %343, %344 : vector<8x128xf32>
    %346 = math.rsqrt %345 : vector<8x128xf32>
    %347 = arith.mulf %342, %346 : vector<8x128xf32>
    %348 = arith.mulf %252, %338 : vector<8x128xf32>
    %349 = arith.mulf %256, %337 : vector<8x128xf32>
    %350 = arith.addf %349, %255 : vector<8x128xf32>
    %351 = math.cos %336#2 : vector<8x128xf32>
    %352 = arith.mulf %252, %351 : vector<8x128xf32>
    %353 = arith.subf %264, %352 : vector<8x128xf32>
    %354 = math.sin %336#2 : vector<8x128xf32>
    %355 = arith.mulf %256, %354 : vector<8x128xf32>
    %356 = arith.addf %355, %255 : vector<8x128xf32>
    %357 = arith.subf %261, %356 : vector<8x128xf32>
    %cst_125 = arith.constant 0.000000e+00 : f32
    %358 = vector.broadcast %cst_125 : f32 to vector<8x128xf32>
    %359 = arith.subf %358, %347 : vector<8x128xf32>
    %360 = arith.mulf %359, %348 : vector<8x128xf32>
    %361 = arith.subf %350, %255 : vector<8x128xf32>
    %362 = arith.mulf %346, %361 : vector<8x128xf32>
    %363 = arith.addf %360, %362 : vector<8x128xf32>
    %cst_126 = arith.constant 0.000000e+00 : f32
    %364 = vector.broadcast %cst_126 : f32 to vector<8x128xf32>
    %365 = arith.cmpf ogt, %363, %364 : vector<8x128xf32>
    %cst_127 = arith.constant 1.000000e+00 : f32
    %cst_128 = arith.constant 0.000000e+00 : f32
    %366 = vector.broadcast %cst_127 : f32 to vector<8x128xf32>
    %367 = vector.broadcast %cst_128 : f32 to vector<8x128xf32>
    %368 = arith.select %365, %366, %367 : vector<8x128xi1>, vector<8x128xf32>
    %cst_129 = arith.constant 0.000000e+00 : f32
    %369 = vector.broadcast %cst_129 : f32 to vector<8x128xf32>
    %370 = arith.cmpf olt, %363, %369 : vector<8x128xf32>
    %cst_130 = arith.constant 1.000000e+00 : f32
    %cst_131 = arith.constant 0.000000e+00 : f32
    %371 = vector.broadcast %cst_130 : f32 to vector<8x128xf32>
    %372 = vector.broadcast %cst_131 : f32 to vector<8x128xf32>
    %373 = arith.select %370, %371, %372 : vector<8x128xi1>, vector<8x128xf32>
    %374 = arith.subf %368, %373 : vector<8x128xf32>
    %375 = arith.mulf %359, %374 : vector<8x128xf32>
    %376 = arith.mulf %346, %374 : vector<8x128xf32>
    %377 = arith.mulf %353, %375 : vector<8x128xf32>
    %378 = arith.mulf %357, %376 : vector<8x128xf32>
    %379 = arith.addf %377, %378 : vector<8x128xf32>
    %cst_132 = arith.constant 0.000000e+00 : f32
    %380 = vector.broadcast %cst_132 : f32 to vector<8x128xf32>
    %381 = arith.maximumf %379, %380 : vector<8x128xf32>
    %cst_133 = arith.constant 0.404061019 : f32
    %382 = vector.broadcast %cst_133 : f32 to vector<8x128xf32>
    %383 = arith.mulf %381, %382 : vector<8x128xf32>
    %cst_134 = arith.constant 0.327591091 : f32
    %384 = vector.broadcast %cst_134 : f32 to vector<8x128xf32>
    %385 = arith.mulf %384, %383 : vector<8x128xf32>
    %cst_135 = arith.constant 1.000000e+00 : f32
    %386 = vector.broadcast %cst_135 : f32 to vector<8x128xf32>
    %387 = arith.addf %386, %385 : vector<8x128xf32>
    %388 = tpu.reciprocal %387 {approx = true} : vector<8x128xf32> -> vector<8x128xf32>
    %cst_136 = arith.constant 1.06140542 : f32
    %389 = vector.broadcast %cst_136 : f32 to vector<8x128xf32>
    %390 = arith.mulf %388, %389 : vector<8x128xf32>
    %cst_137 = arith.constant -1.45315206 : f32
    %391 = vector.broadcast %cst_137 : f32 to vector<8x128xf32>
    %392 = arith.addf %391, %390 : vector<8x128xf32>
    %393 = arith.mulf %388, %392 : vector<8x128xf32>
    %cst_138 = arith.constant 1.42141378 : f32
    %394 = vector.broadcast %cst_138 : f32 to vector<8x128xf32>
    %395 = arith.addf %394, %393 : vector<8x128xf32>
    %396 = arith.mulf %388, %395 : vector<8x128xf32>
    %cst_139 = arith.constant -0.284496725 : f32
    %397 = vector.broadcast %cst_139 : f32 to vector<8x128xf32>
    %398 = arith.addf %397, %396 : vector<8x128xf32>
    %399 = arith.mulf %388, %398 : vector<8x128xf32>
    %cst_140 = arith.constant 0.254829586 : f32
    %400 = vector.broadcast %cst_140 : f32 to vector<8x128xf32>
    %401 = arith.addf %400, %399 : vector<8x128xf32>
    %402 = arith.mulf %388, %401 : vector<8x128xf32>
    %cst_141 = arith.constant 0.000000e+00 : f32
    %403 = vector.broadcast %cst_141 : f32 to vector<8x128xf32>
    %404 = arith.subf %403, %383 : vector<8x128xf32>
    %405 = arith.mulf %404, %383 : vector<8x128xf32>
    %406 = math.exp %405 : vector<8x128xf32>
    %407 = arith.mulf %402, %406 : vector<8x128xf32>
    %cst_142 = arith.constant 1.000000e+00 : f32
    %408 = vector.broadcast %cst_142 : f32 to vector<8x128xf32>
    %409 = arith.subf %408, %407 : vector<8x128xf32>
    %c0_143 = arith.constant 0 : index
    %c0_144 = arith.constant 0 : index
    %410 = vector.load %arg8[%c0_143, %c0_144] : memref<8x1xf32, #tpu.memory_space<vmem>>, vector<8x1xf32>
    %411 = vector.broadcast %410 : vector<8x1xf32> to vector<8x128xf32>
    %412 = arith.mulf %409, %411 : vector<8x128xf32>
    %cst_145 = arith.constant dense<0.000000e+00> : vector<128xf32>
    %413 = vector.multi_reduction <add>, %412, %cst_145 [0] : vector<8x128xf32> to vector<128xf32>
    %414 = vector.shape_cast %413 : vector<128xf32> to vector<1x128xf32>
    %cst_146 = arith.constant 0.000000e+00 : f32
    %415 = vector.broadcast %cst_146 : f32 to vector<1x128xf32>
    %416 = arith.subf %415, %414 : vector<1x128xf32>
    %417 = math.exp %416 : vector<1x128xf32>
    %c0_147 = arith.constant 0 : index
    %c0_148 = arith.constant 0 : index
    %c0_149 = arith.constant 0 : index
    %418 = vector.load %arg9[%c0_147, %c0_148, %c0_149] : memref<9x8x128xf32, #tpu.memory_space<vmem>>, vector<1x8x128xf32>
    %419 = vector.shape_cast %418 : vector<1x8x128xf32> to vector<8x128xf32>
    %420 = vector.shape_cast %348 : vector<8x128xf32> to vector<1x8x128xf32>
    tpu.vector_store %arg9[%c0_147, %c0_148, %c0_149], %420 {strides = array<i32>} : memref<9x8x128xf32, #tpu.memory_space<vmem>>, vector<1x8x128xf32>,
    %c1_150 = arith.constant 1 : index
    %c0_151 = arith.constant 0 : index
    %c0_152 = arith.constant 0 : index
    %421 = vector.load %arg9[%c1_150, %c0_151, %c0_152] : memref<9x8x128xf32, #tpu.memory_space<vmem>>, vector<1x8x128xf32>
    %422 = vector.shape_cast %421 : vector<1x8x128xf32> to vector<8x128xf32>
    %423 = vector.shape_cast %350 : vector<8x128xf32> to vector<1x8x128xf32>
    tpu.vector_store %arg9[%c1_150, %c0_151, %c0_152], %423 {strides = array<i32>} : memref<9x8x128xf32, #tpu.memory_space<vmem>>, vector<1x8x128xf32>,
    %c2_153 = arith.constant 2 : index
    %c0_154 = arith.constant 0 : index
    %c0_155 = arith.constant 0 : index
    %424 = vector.load %arg9[%c2_153, %c0_154, %c0_155] : memref<9x8x128xf32, #tpu.memory_space<vmem>>, vector<1x8x128xf32>
    %425 = vector.shape_cast %424 : vector<1x8x128xf32> to vector<8x128xf32>
    %426 = vector.shape_cast %375 : vector<8x128xf32> to vector<1x8x128xf32>
    tpu.vector_store %arg9[%c2_153, %c0_154, %c0_155], %426 {strides = array<i32>} : memref<9x8x128xf32, #tpu.memory_space<vmem>>, vector<1x8x128xf32>,
    %c3_156 = arith.constant 3 : index
    %c0_157 = arith.constant 0 : index
    %c0_158 = arith.constant 0 : index
    %427 = vector.load %arg9[%c3_156, %c0_157, %c0_158] : memref<9x8x128xf32, #tpu.memory_space<vmem>>, vector<1x8x128xf32>
    %428 = vector.shape_cast %427 : vector<1x8x128xf32> to vector<8x128xf32>
    %429 = vector.shape_cast %376 : vector<8x128xf32> to vector<1x8x128xf32>
    tpu.vector_store %arg9[%c3_156, %c0_157, %c0_158], %429 {strides = array<i32>} : memref<9x8x128xf32, #tpu.memory_space<vmem>>, vector<1x8x128xf32>,
    %c4_159 = arith.constant 4 : index
    %c0_160 = arith.constant 0 : index
    %c0_161 = arith.constant 0 : index
    %430 = vector.load %arg9[%c4_159, %c0_160, %c0_161] : memref<9x8x128xf32, #tpu.memory_space<vmem>>, vector<1x8x128xf32>
    %431 = vector.shape_cast %430 : vector<1x8x128xf32> to vector<8x128xf32>
    %432 = vector.shape_cast %255 : vector<8x128xf32> to vector<1x8x128xf32>
    tpu.vector_store %arg9[%c4_159, %c0_160, %c0_161], %432 {strides = array<i32>} : memref<9x8x128xf32, #tpu.memory_space<vmem>>, vector<1x8x128xf32>,
    %c5_162 = arith.constant 5 : index
    %c0_163 = arith.constant 0 : index
    %c0_164 = arith.constant 0 : index
    %433 = vector.load %arg9[%c5_162, %c0_163, %c0_164] : memref<9x8x128xf32, #tpu.memory_space<vmem>>, vector<1x8x128xf32>
    %434 = vector.shape_cast %433 : vector<1x8x128xf32> to vector<8x128xf32>
    %435 = vector.shape_cast %252 : vector<8x128xf32> to vector<1x8x128xf32>
    tpu.vector_store %arg9[%c5_162, %c0_163, %c0_164], %435 {strides = array<i32>} : memref<9x8x128xf32, #tpu.memory_space<vmem>>, vector<1x8x128xf32>,
    %c6 = arith.constant 6 : index
    %c0_165 = arith.constant 0 : index
    %c0_166 = arith.constant 0 : index
    %436 = vector.load %arg9[%c6, %c0_165, %c0_166] : memref<9x8x128xf32, #tpu.memory_space<vmem>>, vector<1x8x128xf32>
    %437 = vector.shape_cast %436 : vector<1x8x128xf32> to vector<8x128xf32>
    %438 = vector.shape_cast %256 : vector<8x128xf32> to vector<1x8x128xf32>
    tpu.vector_store %arg9[%c6, %c0_165, %c0_166], %438 {strides = array<i32>} : memref<9x8x128xf32, #tpu.memory_space<vmem>>, vector<1x8x128xf32>,
    %c7 = arith.constant 7 : index
    %c0_167 = arith.constant 0 : index
    %c0_168 = arith.constant 0 : index
    %439 = vector.load %arg9[%c7, %c0_167, %c0_168] : memref<9x8x128xf32, #tpu.memory_space<vmem>>, vector<1x8x128xf32>
    %440 = vector.shape_cast %439 : vector<1x8x128xf32> to vector<8x128xf32>
    %441 = vector.shape_cast %379 : vector<8x128xf32> to vector<1x8x128xf32>
    tpu.vector_store %arg9[%c7, %c0_167, %c0_168], %441 {strides = array<i32>} : memref<9x8x128xf32, #tpu.memory_space<vmem>>, vector<1x8x128xf32>,
    %c8 = arith.constant 8 : index
    %c0_169 = arith.constant 0 : index
    %c0_170 = arith.constant 0 : index
    %442 = vector.load %arg9[%c8, %c0_169, %c0_170] : memref<9x8x128xf32, #tpu.memory_space<vmem>>, vector<1x8x128xf32>
    %443 = vector.shape_cast %442 : vector<1x8x128xf32> to vector<8x128xf32>
    %444 = vector.shape_cast %409 : vector<8x128xf32> to vector<1x8x128xf32>
    tpu.vector_store %arg9[%c8, %c0_169, %c0_170], %444 {strides = array<i32>} : memref<9x8x128xf32, #tpu.memory_space<vmem>>, vector<1x8x128xf32>,
    %c0_171 = arith.constant 0 : index
    %c0_172 = arith.constant 0 : index
    %445 = vector.load %arg10[%c0_171, %c0_172] : memref<1x128xf32, #tpu.memory_space<vmem>>, vector<1x128xf32>
    tpu.vector_store %arg10[%c0_171, %c0_172], %417 {strides = array<i32>} : memref<1x128xf32, #tpu.memory_space<vmem>>, vector<1x128xf32>,
    return
  }
  func.func @transform_0(%arg0: i32) -> (i32, i32, i32) {
    %c0_i32 = arith.constant 0 : i32
    %c0_i32_0 = arith.constant 0 : i32
    %c0_i32_1 = arith.constant 0 : i32
    return %c0_i32, %c0_i32_0, %arg0 : i32, i32, i32
  }
  func.func @transform_1(%arg0: i32) -> i32 {
    %c0_i32 = arith.constant 0 : i32
    %c0_i32_0 = arith.constant 0 : i32
    return %c0_i32 : i32
  }
  func.func @transform_2(%arg0: i32) -> i32 {
    %c0_i32 = arith.constant 0 : i32
    %c0_i32_0 = arith.constant 0 : i32
    return %c0_i32 : i32
  }
  func.func @transform_3(%arg0: i32) -> i32 {
    %c0_i32 = arith.constant 0 : i32
    %c0_i32_0 = arith.constant 0 : i32
    return %c0_i32 : i32
  }
  func.func @transform_4(%arg0: i32) -> i32 {
    %c0_i32 = arith.constant 0 : i32
    %c0_i32_0 = arith.constant 0 : i32
    return %c0_i32 : i32
  }
  func.func @transform_5(%arg0: i32) -> i32 {
    %c0_i32 = arith.constant 0 : i32
    %c0_i32_0 = arith.constant 0 : i32
    return %c0_i32 : i32
  }
  func.func @transform_6(%arg0: i32) -> i32 {
    %c0_i32 = arith.constant 0 : i32
    %c0_i32_0 = arith.constant 0 : i32
    return %c0_i32 : i32
  }
  func.func @transform_7(%arg0: i32) -> (i32, i32) {
    %c0_i32 = arith.constant 0 : i32
    %c0_i32_0 = arith.constant 0 : i32
    %c0_i32_1 = arith.constant 0 : i32
    return %c0_i32, %c0_i32_0 : i32, i32
  }
  func.func @transform_8(%arg0: i32) -> (i32, i32, i32) {
    %c0_i32 = arith.constant 0 : i32
    %c0_i32_0 = arith.constant 0 : i32
    %c0_i32_1 = arith.constant 0 : i32
    return %c0_i32, %c0_i32_0, %arg0 : i32, i32, i32
  }
  func.func @transform_9(%arg0: i32) -> (i32, i32) {
    %c0_i32 = arith.constant 0 : i32
    %c0_i32_0 = arith.constant 0 : i32
    return %c0_i32, %arg0 : i32, i32
  }
}

</mosaic_0001>

<llo_original>
// kernel: tpu_custom_call.1
$region0: #{tpu_custom_call.1}
  #allocation0 [shape = 'u32[]', space=smem, size = 0x4, offset = 0x4, fixed_abs, tag = 'smem constant byte address 0x4 - core index']
  #allocation1 [shape = 'u32[144,128]{1,0:T(1,128)}', space=vmem, size = 0x12000, scoped, tag = 'internal scratch']
  %s0 = inlined_call_operand.hbm [shape: f32[4,8,128], index: 0, kind: input, shape index: {}]
  %s1 = inlined_call_operand.vmem [shape: f32[6], index: 1, kind: input, shape index: {}]
  %s2 = inlined_call_operand.vmem [shape: f32[6], index: 2, kind: input, shape index: {}]
  %s3 = inlined_call_operand.vmem [shape: f32[6], index: 3, kind: input, shape index: {}]
  %s4 = inlined_call_operand.vmem [shape: f32[6], index: 4, kind: input, shape index: {}]
  %s5 = inlined_call_operand.vmem [shape: f32[6], index: 5, kind: input, shape index: {}]
  %s6 = inlined_call_operand.vmem [shape: f32[6], index: 6, kind: input, shape index: {}]
  %s7 = inlined_call_operand.vmem [shape: f32[8,1], index: 7, kind: input, shape index: {}]
  %s8 = inlined_call_operand.hbm [shape: f32[9,8,128], index: 8, kind: output, shape index: {0}]
  %s9 = inlined_call_operand.hbm [shape: f32[1,128], index: 9, kind: output, shape index: {1}]
  %10 = xla_tuple %s8, %s9
  %s11 = sld [smem:[#allocation0]]
  $region85: #{tpu_custom_call.1} parent=0
    _
  %s13 = ssub.s32 1, %s11
  %s14 = scalar_select 0, %s13, %s11
  $region1: #{tpu_custom_call.1} parent=0
    #allocation2 [shape = 'u8[16384]{0}', space=vmem, size = 0x4000, scoped, tag = 'input window, operand 0, single buffered']
    #allocation3 [shape = 's32[1]{0}', space=sflag, size = 0x4, scoped, tag = 'scoped memory for tpu_custom_call.1']
    #allocation4 [shape = 's32[1]{0}', space=sflag, size = 0x4, scoped, tag = 'scoped memory for tpu_custom_call.1']
    #allocation5 [shape = 's32[1]{0}', space=sflag, size = 0x4, scoped, tag = 'scoped memory for tpu_custom_call.1']
    #allocation6 [shape = 'u8[512]{0}', space=smem, size = 0x200, scoped, tag = 'input window, operand 1, single buffered']
    #allocation7 [shape = 'u8[512]{0}', space=smem, size = 0x200, scoped, tag = 'input window, operand 2, single buffered']
    #allocation8 [shape = 's32[1]{0}', space=sflag, size = 0x4, scoped, tag = 'scoped memory for tpu_custom_call.1']
    #allocation9 [shape = 'u8[512]{0}', space=smem, size = 0x200, scoped, tag = 'input window, operand 3, single buffered']
    #allocation10 [shape = 'u8[512]{0}', space=smem, size = 0x200, scoped, tag = 'input window, operand 4, single buffered']
    #allocation11 [shape = 's32[1]{0}', space=sflag, size = 0x4, scoped, tag = 'scoped memory for tpu_custom_call.1']
    #allocation12 [shape = 'u8[512]{0}', space=smem, size = 0x200, scoped, tag = 'input window, operand 5, single buffered']
    #allocation13 [shape = 'u8[512]{0}', space=smem, size = 0x200, scoped, tag = 'input window, operand 6, single buffered']
    #allocation14 [shape = 's32[1]{0}', space=sflag, size = 0x4, scoped, tag = 'scoped memory for tpu_custom_call.1']
    #allocation15 [shape = 'u8[36864]{0}', space=vmem, size = 0x9000, scoped, tag = 'output window, operand 0, single buffered']
    #allocation16 [shape = 'u8[512]{0}', space=vmem, size = 0x400, scoped, tag = 'output window, operand 1, single buffered']
    #allocation17 [shape = 's32[1]{0}', space=sflag, size = 0x4, scoped, tag = 'scoped memory for tpu_custom_call.1']
    %15 = vsyncpa [#allocation3], 0
    %16 = vsyncpa [#allocation5], 0
    %17 = vsyncpa [#allocation8], 0
    %18 = vsyncpa [#allocation11], 0
    %19 = vsyncpa [#allocation14], 0
    %20 = vsyncpa [#allocation4], 0
    %21 = vsyncpa [#allocation17], 0
    // Predicated region
    $region2: #{tpu_custom_call.1} parent=1 // pred_check
      _
    $region3: #{tpu_custom_call.1} parent=1 // pred_check_branch
      %23 = sbr.rel (0) target = $region5
    $region4: #{tpu_custom_call.1} parent=1 // pred_region
      %s25 = ssub.s32 512, 512
      %26 = vsyncadd [#allocation3], %s25
      %s27 = sshll.u32 [#allocation2], 4
      %s28 = int_to_ptr.vmem [resolvable:$true] %s27
      %33 = dma.hbm_to_vmem [thread:$0]  %s0, 512, %s28, [#allocation3], 128, 128, 8
    $region5: #{tpu_custom_call.1} parent=1 // pred_fallthru
      _
    // Predicated region
    $region6: #{tpu_custom_call.1} parent=1 // pred_check
      _
    $region7: #{tpu_custom_call.1} parent=1 // pred_check_branch
      %35 = sbr.rel (0) target = $region9
    $region8: #{tpu_custom_call.1} parent=1 // pred_region
      %s37 = ssub.s32 16, 16
      %38 = vsyncadd [#allocation5], %s37
      %s40 = sshll.u32 %s1, 4
      %s41 = int_to_ptr.vmem [resolvable:$true] %s40
      %43 = dma.vmem_to_smem %s41, 16, [#allocation6], [#allocation5]
    $region9: #{tpu_custom_call.1} parent=1 // pred_fallthru
      _
    // Predicated region
    $region10: #{tpu_custom_call.1} parent=1 // pred_check
      _
    $region11: #{tpu_custom_call.1} parent=1 // pred_check_branch
      %45 = sbr.rel (0) target = $region13
    $region12: #{tpu_custom_call.1} parent=1 // pred_region
      %s47 = ssub.s32 16, 16
      %48 = vsyncadd [#allocation8], %s47
      %s50 = sshll.u32 %s2, 4
      %s51 = int_to_ptr.vmem [resolvable:$true] %s50
      %53 = dma.vmem_to_smem %s51, 16, [#allocation7], [#allocation8]
    $region13: #{tpu_custom_call.1} parent=1 // pred_fallthru
      _
    // Predicated region
    $region14: #{tpu_custom_call.1} parent=1 // pred_check
      _
    $region15: #{tpu_custom_call.1} parent=1 // pred_check_branch
      %55 = sbr.rel (0) target = $region17
    $region16: #{tpu_custom_call.1} parent=1 // pred_region
      %s57 = ssub.s32 16, 16
      %58 = vsyncadd [#allocation8], %s57
      %s60 = sshll.u32 %s3, 4
      %s61 = int_to_ptr.vmem [resolvable:$true] %s60
      %63 = dma.vmem_to_smem %s61, 16, [#allocation9], [#allocation8]
    $region17: #{tpu_custom_call.1} parent=1 // pred_fallthru
      _
    // Predicated region
    $region18: #{tpu_custom_call.1} parent=1 // pred_check
      _
    $region19: #{tpu_custom_call.1} parent=1 // pred_check_branch
      %65 = sbr.rel (0) target = $region21
    $region20: #{tpu_custom_call.1} parent=1 // pred_region
      %s67 = ssub.s32 16, 16
      %68 = vsyncadd [#allocation11], %s67
      %s70 = sshll.u32 %s4, 4
      %s71 = int_to_ptr.vmem [resolvable:$true] %s70
      %73 = dma.vmem_to_smem %s71, 16, [#allocation10], [#allocation11]
    $region21: #{tpu_custom_call.1} parent=1 // pred_fallthru
      _
    // Predicated region
    $region22: #{tpu_custom_call.1} parent=1 // pred_check
      _
    $region23: #{tpu_custom_call.1} parent=1 // pred_check_branch
      %75 = sbr.rel (0) target = $region25
    $region24: #{tpu_custom_call.1} parent=1 // pred_region
      %s77 = ssub.s32 16, 16
      %78 = vsyncadd [#allocation11], %s77
      %s80 = sshll.u32 %s5, 4
      %s81 = int_to_ptr.vmem [resolvable:$true] %s80
      %83 = dma.vmem_to_smem %s81, 16, [#allocation12], [#allocation11]
    $region25: #{tpu_custom_call.1} parent=1 // pred_fallthru
      _
    // Predicated region
    $region26: #{tpu_custom_call.1} parent=1 // pred_check
      _
    $region27: #{tpu_custom_call.1} parent=1 // pred_check_branch
      %85 = sbr.rel (0) target = $region29
    $region28: #{tpu_custom_call.1} parent=1 // pred_region
      %s87 = ssub.s32 16, 16
      %88 = vsyncadd [#allocation14], %s87
      %s90 = sshll.u32 %s6, 4
      %s91 = int_to_ptr.vmem [resolvable:$true] %s90
      %93 = dma.vmem_to_smem %s91, 16, [#allocation13], [#allocation14]
    $region29: #{tpu_custom_call.1} parent=1 // pred_fallthru
      _
    // Predicated region
    $region30: #{tpu_custom_call.1} parent=1 // pred_check
      _
    $region31: #{tpu_custom_call.1} parent=1 // pred_check_branch
      %95 = sbr.rel (0) target = $region33
    $region32: #{tpu_custom_call.1} parent=1 // pred_region
      _
    $region33: #{tpu_custom_call.1} parent=1 // pred_fallthru
      _
    // Predicated region
    $region34: #{tpu_custom_call.1} parent=1 // pred_check
      _
    $region35: #{tpu_custom_call.1} parent=1 // pred_check_branch
      %97 = sbr.rel (0) target = $region37
    $region36: #{tpu_custom_call.1} parent=1 // pred_region
      %98 = dma.done [#allocation3], 512
    $region37: #{tpu_custom_call.1} parent=1 // pred_fallthru
      _
    // Predicated region
    $region38: #{tpu_custom_call.1} parent=1 // pred_check
      _
    $region39: #{tpu_custom_call.1} parent=1 // pred_check_branch
      %100 = sbr.rel (0) target = $region41
    $region40: #{tpu_custom_call.1} parent=1 // pred_region
      %101 = dma.done [#allocation5], 16
    $region41: #{tpu_custom_call.1} parent=1 // pred_fallthru
      _
    // Predicated region
    $region42: #{tpu_custom_call.1} parent=1 // pred_check
      _
    $region43: #{tpu_custom_call.1} parent=1 // pred_check_branch
      %103 = sbr.rel (0) target = $region45
    $region44: #{tpu_custom_call.1} parent=1 // pred_region
      %104 = dma.done [#allocation8], 16
    $region45: #{tpu_custom_call.1} parent=1 // pred_fallthru
      _
    // Predicated region
    $region46: #{tpu_custom_call.1} parent=1 // pred_check
      _
    $region47: #{tpu_custom_call.1} parent=1 // pred_check_branch
      %106 = sbr.rel (0) target = $region49
    $region48: #{tpu_custom_call.1} parent=1 // pred_region
      %107 = dma.done [#allocation8], 16
    $region49: #{tpu_custom_call.1} parent=1 // pred_fallthru
      _
    // Predicated region
    $region50: #{tpu_custom_call.1} parent=1 // pred_check
      _
    $region51: #{tpu_custom_call.1} parent=1 // pred_check_branch
      %109 = sbr.rel (0) target = $region53
    $region52: #{tpu_custom_call.1} parent=1 // pred_region
      %110 = dma.done [#allocation11], 16
    $region53: #{tpu_custom_call.1} parent=1 // pred_fallthru
      _
    // Predicated region
    $region54: #{tpu_custom_call.1} parent=1 // pred_check
      _
    $region55: #{tpu_custom_call.1} parent=1 // pred_check_branch
      %112 = sbr.rel (0) target = $region57
    $region56: #{tpu_custom_call.1} parent=1 // pred_region
      %113 = dma.done [#allocation11], 16
    $region57: #{tpu_custom_call.1} parent=1 // pred_fallthru
      _
    // Predicated region
    $region58: #{tpu_custom_call.1} parent=1 // pred_check
      _
    $region59: #{tpu_custom_call.1} parent=1 // pred_check_branch
      %115 = sbr.rel (0) target = $region61
    $region60: #{tpu_custom_call.1} parent=1 // pred_region
      %116 = dma.done [#allocation14], 16
    $region61: #{tpu_custom_call.1} parent=1 // pred_fallthru
      _
    %117 = sfence
    %v118 = vld [vmem:[#allocation2] sm:$0xff]
    %s119 = scalar_lea.vmem [#allocation2], 8
    %v120 = vld [vmem:[%s119] sm:$0xff]
    %s121 = scalar_lea.vmem [#allocation2], 16
    %v122 = vld [vmem:[%s121] sm:$0xff]
    %s123 = scalar_lea.vmem [#allocation2], 24
    %v124 = vld [vmem:[%s123] sm:$0xff]
    %v125 = vmul.f32 %v118, %v118
    %v126 = vmul.f32 %v120, %v120
    %v127 = vadd.f32 %v125, %v126
    %v128 = vrsqrt.pop %v127
    %v129 = vmul.f32 %v127, %v128
    %vm130 = vcmp.eq.f32.partialorder %v127, inf
    %v131 = vsel %vm130, %v127, %v129
    %vm132 = vcmp.eq.f32.partialorder %v127, 0.0
    %v133 = vand.u32 %v127, 2147483648
    %v134 = vsel %vm132, %v133, %v131
    %v135 = vrcp.pop %v134
    %v136 = vmul.f32 %v118, %v135
    %v137 = vmul.f32 %v120, %v135
    %v138 = vsub.f32 0.0, %v137
    %s139 = sld [smem:[#allocation7]]
    %s140 = sld [smem:[#allocation7 + $0x1]]
    %s141 = ssub.f32 %s140, %s139
    %s142 = sld [smem:[#allocation6 + $0x1]]
    %s143 = sld [smem:[#allocation6]]
    %s144 = ssub.f32 %s142, %s143
    %v145 = vstv %s144
    %v146 = vrcp.pop %v145
    %s147 = vtos %v146
    %s148 = smul.f32 %s141, %s147
    %v149 = vstv %s143
    %v150 = vsub.f32 %v134, %v149
    %v151 = vstv %s148
    %v152 = vmul.f32 %v151, %v150
    %v153 = vstv %s139
    %v154 = vadd.f32 %v153, %v152
    %s155 = sld [smem:[#allocation7 + $0x2]]
    %s156 = ssub.f32 %s155, %s140
    %s157 = sld [smem:[#allocation6 + $0x2]]
    %s158 = ssub.f32 %s157, %s142
    %v159 = vstv %s158
    %v160 = vrcp.pop %v159
    %s161 = vtos %v160
    %s162 = smul.f32 %s156, %s161
    %s163 = ssub.f32 %s162, %s148
    %v164 = vstv %s142
    %v165 = vsub.f32 %v134, %v164
    %v166 = vmax.f32 %v165, 0.0
    %v167 = vstv %s163
    %v168 = vmul.f32 %v167, %v166
    %v169 = vadd.f32 %v154, %v168
    %s170 = sld [smem:[#allocation7 + $0x3]]
    %s171 = ssub.f32 %s170, %s155
    %s172 = sld [smem:[#allocation6 + $0x3]]
    %s173 = ssub.f32 %s172, %s157
    %v174 = vstv %s173
    %v175 = vrcp.pop %v174
    %s176 = vtos %v175
    %s177 = smul.f32 %s171, %s176
    %s178 = ssub.f32 %s177, %s162
    %v179 = vstv %s157
    %v180 = vsub.f32 %v134, %v179
    %v181 = vmax.f32 %v180, 0.0
    %v182 = vstv %s178
    %v183 = vmul.f32 %v182, %v181
    %v184 = vadd.f32 %v169, %v183
    %s185 = sld [smem:[#allocation7 + $0x4]]
    %s186 = ssub.f32 %s185, %s170
    %s187 = sld [smem:[#allocation6 + $0x4]]
    %s188 = ssub.f32 %s187, %s172
    %v189 = vstv %s188
    %v190 = vrcp.pop %v189
    %s191 = vtos %v190
    %s192 = smul.f32 %s186, %s191
    %s193 = ssub.f32 %s192, %s177
    %v194 = vstv %s172
    %v195 = vsub.f32 %v134, %v194
    %v196 = vmax.f32 %v195, 0.0
    %v197 = vstv %s193
    %v198 = vmul.f32 %v197, %v196
    %v199 = vadd.f32 %v184, %v198
    %s200 = sld [smem:[#allocation7 + $0x5]]
    %s201 = ssub.f32 %s200, %s185
    %s202 = sld [smem:[#allocation6 + $0x5]]
    %s203 = ssub.f32 %s202, %s187
    %v204 = vstv %s203
    %v205 = vrcp.pop %v204
    %s206 = vtos %v205
    %s207 = smul.f32 %s201, %s206
    %s208 = ssub.f32 %s207, %s192
    %v209 = vstv %s187
    %v210 = vsub.f32 %v134, %v209
    %v211 = vmax.f32 %v210, 0.0
    %v212 = vstv %s208
    %v213 = vmul.f32 %v212, %v211
    %v214 = vadd.f32 %v199, %v213
    %s215 = sld [smem:[#allocation10]]
    %s216 = sld [smem:[#allocation10 + $0x1]]
    %s217 = ssub.f32 %s216, %s215
    %s218 = sld [smem:[#allocation9 + $0x1]]
    %s219 = sld [smem:[#allocation9]]
    %s220 = ssub.f32 %s218, %s219
    %v221 = vstv %s220
    %v222 = vrcp.pop %v221
    %s223 = vtos %v222
    %s224 = smul.f32 %s217, %s223
    %v225 = vstv %s219
    %v226 = vsub.f32 %v134, %v225
    %v227 = vstv %s224
    %v228 = vmul.f32 %v227, %v226
    %v229 = vstv %s215
    %v230 = vadd.f32 %v229, %v228
    %s231 = sld [smem:[#allocation10 + $0x2]]
    %s232 = ssub.f32 %s231, %s216
    %s233 = sld [smem:[#allocation9 + $0x2]]
    %s234 = ssub.f32 %s233, %s218
    %v235 = vstv %s234
    %v236 = vrcp.pop %v235
    %s237 = vtos %v236
    %s238 = smul.f32 %s232, %s237
    %s239 = ssub.f32 %s238, %s224
    %v240 = vstv %s218
    %v241 = vsub.f32 %v134, %v240
    %v242 = vmax.f32 %v241, 0.0
    %v243 = vstv %s239
    %v244 = vmul.f32 %v243, %v242
    %v245 = vadd.f32 %v230, %v244
    %s246 = sld [smem:[#allocation10 + $0x3]]
    %s247 = ssub.f32 %s246, %s231
    %s248 = sld [smem:[#allocation9 + $0x3]]
    %s249 = ssub.f32 %s248, %s233
    %v250 = vstv %s249
    %v251 = vrcp.pop %v250
    %s252 = vtos %v251
    %s253 = smul.f32 %s247, %s252
    %s254 = ssub.f32 %s253, %s238
    %v255 = vstv %s233
    %v256 = vsub.f32 %v134, %v255
    %v257 = vmax.f32 %v256, 0.0
    %v258 = vstv %s254
    %v259 = vmul.f32 %v258, %v257
    %v260 = vadd.f32 %v245, %v259
    %s261 = sld [smem:[#allocation10 + $0x4]]
    %s262 = ssub.f32 %s261, %s246
    %s263 = sld [smem:[#allocation9 + $0x4]]
    %s264 = ssub.f32 %s263, %s248
    %v265 = vstv %s264
    %v266 = vrcp.pop %v265
    %s267 = vtos %v266
    %s268 = smul.f32 %s262, %s267
    %s269 = ssub.f32 %s268, %s253
    %v270 = vstv %s248
    %v271 = vsub.f32 %v134, %v270
    %v272 = vmax.f32 %v271, 0.0
    %v273 = vstv %s269
    %v274 = vmul.f32 %v273, %v272
    %v275 = vadd.f32 %v260, %v274
    %s276 = sld [smem:[#allocation10 + $0x5]]
    %s277 = ssub.f32 %s276, %s261
    %s278 = sld [smem:[#allocation9 + $0x5]]
    %s279 = ssub.f32 %s278, %s263
    %v280 = vstv %s279
    %v281 = vrcp.pop %v280
    %s282 = vtos %v281
    %s283 = smul.f32 %s277, %s282
    %s284 = ssub.f32 %s283, %s268
    %v285 = vstv %s263
    %v286 = vsub.f32 %v134, %v285
    %v287 = vmax.f32 %v286, 0.0
    %v288 = vstv %s284
    %v289 = vmul.f32 %v288, %v287
    %v290 = vadd.f32 %v275, %v289
    %s291 = sld [smem:[#allocation13]]
    %s292 = sld [smem:[#allocation13 + $0x1]]
    %s293 = ssub.f32 %s292, %s291
    %s294 = sld [smem:[#allocation12 + $0x1]]
    %s295 = sld [smem:[#allocation12]]
    %s296 = ssub.f32 %s294, %s295
    %v297 = vstv %s296
    %v298 = vrcp.pop %v297
    %s299 = vtos %v298
    %s300 = smul.f32 %s293, %s299
    %v301 = vstv %s295
    %v302 = vsub.f32 %v134, %v301
    %v303 = vstv %s300
    %v304 = vmul.f32 %v303, %v302
    %v305 = vstv %s291
    %v306 = vadd.f32 %v305, %v304
    %s307 = sld [smem:[#allocation13 + $0x2]]
    %s308 = ssub.f32 %s307, %s292
    %s309 = sld [smem:[#allocation12 + $0x2]]
    %s310 = ssub.f32 %s309, %s294
    %v311 = vstv %s310
    %v312 = vrcp.pop %v311
    %s313 = vtos %v312
    %s314 = smul.f32 %s308, %s313
    %s315 = ssub.f32 %s314, %s300
    %v316 = vstv %s294
    %v317 = vsub.f32 %v134, %v316
    %v318 = vmax.f32 %v317, 0.0
    %v319 = vstv %s315
    %v320 = vmul.f32 %v319, %v318
    %v321 = vadd.f32 %v306, %v320
    %s322 = sld [smem:[#allocation13 + $0x3]]
    %s323 = ssub.f32 %s322, %s307
    %s324 = sld [smem:[#allocation12 + $0x3]]
    %s325 = ssub.f32 %s324, %s309
    %v326 = vstv %s325
    %v327 = vrcp.pop %v326
    %s328 = vtos %v327
    %s329 = smul.f32 %s323, %s328
    %s330 = ssub.f32 %s329, %s314
    %v331 = vstv %s309
    %v332 = vsub.f32 %v134, %v331
    %v333 = vmax.f32 %v332, 0.0
    %v334 = vstv %s330
    %v335 = vmul.f32 %v334, %v333
    %v336 = vadd.f32 %v321, %v335
    %s337 = sld [smem:[#allocation13 + $0x4]]
    %s338 = ssub.f32 %s337, %s322
    %s339 = sld [smem:[#allocation12 + $0x4]]
    %s340 = ssub.f32 %s339, %s324
    %v341 = vstv %s340
    %v342 = vrcp.pop %v341
    %s343 = vtos %v342
    %s344 = smul.f32 %s338, %s343
    %s345 = ssub.f32 %s344, %s329
    %v346 = vstv %s324
    %v347 = vsub.f32 %v134, %v346
    %v348 = vmax.f32 %v347, 0.0
    %v349 = vstv %s345
    %v350 = vmul.f32 %v349, %v348
    %v351 = vadd.f32 %v336, %v350
    %s352 = sld [smem:[#allocation13 + $0x5]]
    %s353 = ssub.f32 %s352, %s337
    %s354 = sld [smem:[#allocation12 + $0x5]]
    %s355 = ssub.f32 %s354, %s339
    %v356 = vstv %s355
    %v357 = vrcp.pop %v356
    %s358 = vtos %v357
    %s359 = smul.f32 %s353, %s358
    %s360 = ssub.f32 %s359, %s344
    %v361 = vstv %s339
    %v362 = vsub.f32 %v134, %v361
    %v363 = vmax.f32 %v362, 0.0
    %v364 = vstv %s360
    %v365 = vmul.f32 %v364, %v363
    %v366 = vadd.f32 %v351, %v365
    %v367 = vadd.f32 %v214, %v290
    %v368 = vmul.f32 %v367, 0.5
    %v369 = vsub.f32 %v290, %v368
    %v370 = vrcp.pop %v366
    %v371 = vmul.f32 %v369, %v370
    %v372 = vmul.f32 %v371, %v371
    %v373 = vmul.f32 %v122, %v136
    %v374 = vmul.f32 %v124, %v137
    %v375 = vadd.f32 %v373, %v374
    %v376 = vmul.f32 %v122, %v138
    %v377 = vmul.f32 %v124, %v136
    %v378 = vadd.f32 %v376, %v377
    %v379 = vsub.f32 %v375, %v368
    %v380 = vrcp.pop %v378
    %v381 = vmul.f32 %v379, %v380
    %v382 = vand.u32 2147483647, %v381
    %vm383 = vcmp.gt.f32.partialorder %v382, 2.4142137
    %vm384 = vmxor %vm383, 1
    %vm385 = vcmp.gt.f32.partialorder %v382, 0.41421357
    %vm386 = vmand %vm384, %vm385
    %v387 = vrcp.pop %v382
    %v388 = vmul.f32 -1.0, %v387
    %v389 = vsub.f32 %v382, 1.0
    %v390 = vadd.f32 %v382, 1.0
    %v391 = vrcp.pop %v390
    %v392 = vmul.f32 %v389, %v391
    %v393 = vsel %vm386, %v392, %v382
    %v394 = vsel %vm383, %v388, %v393
    %v395 = vsel %vm386, 0.7853982, 0.0
    %v396 = vsel %vm383, 1.5707964, %v395
    %v397 = vmul.f32 %v394, %v394
    %v398 = vmul.f32 %v397, 0.080537446
    %v399 = vsub.f32 %v398, 0.13877685
    %v400 = vmul.f32 %v399, %v397
    %v401 = vadd.f32 %v400, 0.19977711
    %v402 = vmul.f32 %v401, %v397
    %v403 = vsub.f32 %v402, 0.3333295
    %v404 = vmul.f32 %v403, %v397
    %v405 = vmul.f32 %v404, %v394
    %v406 = vadd.f32 %v396, %v405
    %v407 = vadd.f32 %v406, %v394
    %vm408 = vcmp.lt.f32.partialorder %v381, 0.0
    %v409 = vsub.f32 0.0, %v407
    %v410 = vsel %vm408, %v409, %v407
    %vm411 = vcmp.gt.f32.partialorder %v378, 0.0
    %vm412 = vcmp.lt.f32.partialorder %v378, 0.0
    %vm413 = vcmp.ge.f32.partialorder %v379, 0.0
    %v414 = vadd.f32 %v410, 3.1415927
    %v415 = vsub.f32 %v410, 3.1415927
    %v416 = vsel %vm413, %v414, %v415
    %vm417 = vcmp.gt.f32.partialorder %v379, 0.0
    %vm418 = vcmp.lt.f32.partialorder %v379, 0.0
    %v419 = vsel %vm418, -1.5707964, 0.0
    %v420 = vsel %vm417, 1.5707964, %v419
    %v421 = vsel %vm412, %v416, %v420
    %v422 = vsel %vm411, %v410, %v421
    %v423 = vlaneseq
    %v424 = vand.u32 %v423, 127
    %s425 = smul.u32 0, 128
    %v426 = vstv %s425
    %v427 = vadd.s32 %v426, %v424
    %vm428 = vcmp.lt.s32.totalorder %v427, 2
    // While loop
    $region62: #{tpu_custom_call.1} parent=1 // loop_pre_header
      _
    $region63: #{tpu_custom_call.1} parent=1 // loop_header
      %s430 = sphi 0, %s714
      %v431 = vphi %v422, %v687
      %v432 = vphi %v422, %v431
      %s433 = sphi 0, %s713
      %p434 = scmp.lt.s32.totalorder %s430, 20
      %p435 = scmp.eq.s32.totalorder %s433, 0
      %p436 = pnand %p434, %p435
      %p437 = pneg %p436
    $region64: #{tpu_custom_call.1} parent=1 // loop_header_branch
      %439 = sbr.rel (%p436) target = $region68
    $region65: #{tpu_custom_call.1} parent=1 // loop_body
      %v440 = vand.u32 2147483647, %v431
      %vm441 = vcmp.le.f32.partialorder %v440, 0.7853982
      %vm442 = vcmp.lt.s32.totalorder %v431, 0
      %v443 = vand.u32 %v431, 2139095040
      %v444 = vshrl.u32 %v443, 23
      %v445 = vsub.s32 %v444, 127
      %v446 = vand.u32 2147483647, %v431
      %v447 = vand.u32 %v446, 8388607
      %v448 = vor.u32 %v447, 8388608
      %v449 = vsub.s32 0, %v448
      %v450 = vadd.s32 %v445, 1
      %vm451 = vcmp.gt.s32.totalorder %v450, 0
      %v452 = vsel %vm451, %v450, 0
      %v453 = vshrl.u32 %v452, 5
      %v454 = vand.u32 %v452, 31
      %v455 = vsub.s32 32, %v454
      %v456 = vshrl.u32 683565275, %v455
      %v457 = vshll.u32 683565275, %v454
      %v458 = vshrl.u32 2475754826, %v455
      %v459 = vor.u32 %v457, %v458
      %v460 = vshll.u32 2475754826, %v454
      %v461 = vshrl.u32 2131351028, %v455
      %v462 = vor.u32 %v460, %v461
      %v463 = vshll.u32 2131351028, %v454
      %v464 = vshrl.u32 2102212464, %v455
      %v465 = vor.u32 %v463, %v464
      %v466 = vshll.u32 2102212464, %v454
      %v467 = vshrl.u32 920167782, %v455
      %v468 = vor.u32 %v466, %v467
      %v469 = vshll.u32 920167782, %v454
      %v470 = vshrl.u32 1326507024, %v455
      %v471 = vor.u32 %v469, %v470
      %vm472 = vcmp.lt.s32.totalorder %v453, 1
      %vm473 = vcmp.lt.s32.totalorder %v453, 2
      %vm474 = vcmp.lt.s32.totalorder %v453, 3
      %vm475 = vcmp.lt.s32.totalorder %v453, 4
      %v476 = vsel %vm472, %v456, %v459
      %v477 = vsel %vm475, %v465, 2102212464
      %v478 = vsel %vm474, %v462, %v477
      %v479 = vsel %vm473, %v476, %v478
      %v480 = vsel %vm472, %v459, %v462
      %v481 = vsel %vm475, %v468, 920167782
      %v482 = vsel %vm474, %v465, %v481
      %v483 = vsel %vm473, %v480, %v482
      %v484 = vsel %vm472, %v462, %v465
      %v485 = vsel %vm475, %v471, 1326507024
      %v486 = vsel %vm474, %v468, %v485
      %v487 = vsel %vm473, %v484, %v486
      %v488 = vshll.u32 %v448, 8
      %v489 = vmul.u32.u64.compose %v488, %v487
      %v490 = vextract.low.u32 %v489
      %v491 = vextract.high.u32 %v489
      %v492 = vmul.u32.u64.compose %v488, %v483
      %v493 = vextract.low.u32 %v492
      %v494 = vextract.high.u32 %v492
      %v495 = vmul.u32 %v488, %v479
      %v496 = vadd.s32 %v491, %v493
      %vm497 = vc.u32 %v491, %v493
      %v498 = vadd.s32 %v494, 1
      %v499 = vsel %vm497, %v498, %v494
      %v500 = vadd.s32 %v495, %v499
      %v501 = vadd.s32 %v500, 536870912
      %v502 = vshrl.u32 %v501, 30
      %v503 = vshll.u32 %v502, 30
      %v504 = vsub.s32 %v500, %v503
      %vm505 = vcmp.lt.s32.totalorder %v504, 0
      %v506 = vsub.s32 0, %v504
      %v507 = vsel %vm505, %v506, %v504
      %v508 = vclz %v507
      %v509 = vsub.s32 %v508, 2
      %vm510 = vcmp.gt.s32.totalorder 0, %v509
      %v511 = vsel %vm510, 0, %v509
      %v512 = vsub.s32 32, %v511
      %v513 = vshll.u32 %v504, %v511
      %v514 = vshrl.u32 %v496, %v512
      %v515 = vor.u32 %v513, %v514
      %v516 = vsub.s32 4294967266, %v511
      %v517 = vadd.s32 %v516, 127
      %v518 = vshll.u32 %v517, 23
      %v519 = vor.u32 4788187, %v518
      %v520 = vand.u32 2147483647, %v519
      %v522 = vcvt.s32.f32 %v515
      %v523 = vmul.f32 %v522, %v520
      %v524 = vxor.u32 %v523, 2147483648
      %v525 = vsel %vm442, %v524, %v523
      %v526 = vsub.s32 4, %v502
      %v527 = vsel %vm442, %v526, %v502
      %v528 = vsel %vm441, %v431, %v525
      %v529 = vsel %vm441, 0, %v527
      %v530 = vcosq.f32.pop %v528
      %v531 = vsinq.f32.pop %v528
      %vm532 = vweird.f32 %v431
      %v533 = vadd.s32 %v529, 3
      %v534 = vand.u32 %v533, 3
      %vm535 = vcmp.lt.s32.totalorder %v534, 2
      %vm536 = vcmp.eq.s32.totalorder %v534, 0
      %v537 = vxor.u32 %v531, 2147483648
      %v538 = vsel %vm536, %v530, %v537
      %vm539 = vcmp.eq.s32.totalorder %v534, 2
      %v540 = vxor.u32 %v530, 2147483648
      %v541 = vsel %vm539, %v540, %v531
      %v542 = vsel %vm535, %v538, %v541
      %v543 = vsel %vm532, nan, %v542
      %v544 = vand.u32 2147483647, %v431
      %vm545 = vcmp.le.f32.partialorder %v544, 0.7853982
      %vm546 = vcmp.lt.s32.totalorder %v431, 0
      %v547 = vand.u32 %v431, 2139095040
      %v548 = vshrl.u32 %v547, 23
      %v549 = vsub.s32 %v548, 127
      %v550 = vand.u32 2147483647, %v431
      %v551 = vand.u32 %v550, 8388607
      %v552 = vor.u32 %v551, 8388608
      %v553 = vsub.s32 0, %v552
      %v554 = vadd.s32 %v549, 1
      %vm555 = vcmp.gt.s32.totalorder %v554, 0
      %v556 = vsel %vm555, %v554, 0
      %v557 = vshrl.u32 %v556, 5
      %v558 = vand.u32 %v556, 31
      %v559 = vsub.s32 32, %v558
      %v560 = vshrl.u32 683565275, %v559
      %v561 = vshll.u32 683565275, %v558
      %v562 = vshrl.u32 2475754826, %v559
      %v563 = vor.u32 %v561, %v562
      %v564 = vshll.u32 2475754826, %v558
      %v565 = vshrl.u32 2131351028, %v559
      %v566 = vor.u32 %v564, %v565
      %v567 = vshll.u32 2131351028, %v558
      %v568 = vshrl.u32 2102212464, %v559
      %v569 = vor.u32 %v567, %v568
      %v570 = vshll.u32 2102212464, %v558
      %v571 = vshrl.u32 920167782, %v559
      %v572 = vor.u32 %v570, %v571
      %v573 = vshll.u32 920167782, %v558
      %v574 = vshrl.u32 1326507024, %v559
      %v575 = vor.u32 %v573, %v574
      %vm576 = vcmp.lt.s32.totalorder %v557, 1
      %vm577 = vcmp.lt.s32.totalorder %v557, 2
      %vm578 = vcmp.lt.s32.totalorder %v557, 3
      %vm579 = vcmp.lt.s32.totalorder %v557, 4
      %v580 = vsel %vm576, %v560, %v563
      %v581 = vsel %vm579, %v569, 2102212464
      %v582 = vsel %vm578, %v566, %v581
      %v583 = vsel %vm577, %v580, %v582
      %v584 = vsel %vm576, %v563, %v566
      %v585 = vsel %vm579, %v572, 920167782
      %v586 = vsel %vm578, %v569, %v585
      %v587 = vsel %vm577, %v584, %v586
      %v588 = vsel %vm576, %v566, %v569
      %v589 = vsel %vm579, %v575, 1326507024
      %v590 = vsel %vm578, %v572, %v589
      %v591 = vsel %vm577, %v588, %v590
      %v592 = vshll.u32 %v552, 8
      %v593 = vmul.u32.u64.compose %v592, %v591
      %v594 = vextract.low.u32 %v593
      %v595 = vextract.high.u32 %v593
      %v596 = vmul.u32.u64.compose %v592, %v587
      %v597 = vextract.low.u32 %v596
      %v598 = vextract.high.u32 %v596
      %v599 = vmul.u32 %v592, %v583
      %v600 = vadd.s32 %v595, %v597
      %vm601 = vc.u32 %v595, %v597
      %v602 = vadd.s32 %v598, 1
      %v603 = vsel %vm601, %v602, %v598
      %v604 = vadd.s32 %v599, %v603
      %v605 = vadd.s32 %v604, 536870912
      %v606 = vshrl.u32 %v605, 30
      %v607 = vshll.u32 %v606, 30
      %v608 = vsub.s32 %v604, %v607
      %vm609 = vcmp.lt.s32.totalorder %v608, 0
      %v610 = vsub.s32 0, %v608
      %v611 = vsel %vm609, %v610, %v608
      %v612 = vclz %v611
      %v613 = vsub.s32 %v612, 2
      %vm614 = vcmp.gt.s32.totalorder 0, %v613
      %v615 = vsel %vm614, 0, %v613
      %v616 = vsub.s32 32, %v615
      %v617 = vshll.u32 %v608, %v615
      %v618 = vshrl.u32 %v600, %v616
      %v619 = vor.u32 %v617, %v618
      %v620 = vsub.s32 4294967266, %v615
      %v621 = vadd.s32 %v620, 127
      %v622 = vshll.u32 %v621, 23
      %v623 = vor.u32 4788187, %v622
      %v624 = vand.u32 2147483647, %v623
      %v626 = vcvt.s32.f32 %v619
      %v627 = vmul.f32 %v626, %v624
      %v628 = vxor.u32 %v627, 2147483648
      %v629 = vsel %vm546, %v628, %v627
      %v630 = vsub.s32 4, %v606
      %v631 = vsel %vm546, %v630, %v606
      %v632 = vsel %vm545, %v431, %v629
      %v633 = vsel %vm545, 0, %v631
      %v634 = vcosq.f32.pop %v632
      %v635 = vsinq.f32.pop %v632
      %vm636 = vweird.f32 %v431
      %v637 = vand.u32 %v633, 3
      %vm638 = vcmp.lt.s32.totalorder %v637, 2
      %vm639 = vcmp.eq.s32.totalorder %v637, 0
      %v640 = vxor.u32 %v635, 2147483648
      %v641 = vsel %vm639, %v634, %v640
      %vm642 = vcmp.eq.s32.totalorder %v637, 2
      %v643 = vxor.u32 %v634, 2147483648
      %v644 = vsel %vm642, %v643, %v635
      %v645 = vsel %vm638, %v641, %v644
      %v646 = vsel %vm636, nan, %v645
      %v647 = vsub.f32 0.0, %v371
      %v648 = vmul.f32 %v647, %v646
      %v649 = vrcp.pop %v543
      %v650 = vmul.f32 %v648, %v649
      %v651 = vmul.f32 %v650, %v650
      %v652 = vadd.f32 %v651, 1.0
      %v653 = vrsqrt.pop %v652
      %v654 = vmul.f32 %v650, %v653
      %v655 = vmul.f32 %v366, %v646
      %v656 = vmul.f32 %v369, %v543
      %v657 = vadd.f32 %v656, %v368
      %v658 = vsub.f32 %v378, %v655
      %v659 = vsub.f32 %v375, %v657
      %v660 = vmul.f32 %v658, %v653
      %v661 = vmul.f32 %v659, %v654
      %v662 = vadd.f32 %v660, %v661
      %v663 = vmul.f32 %v372, %v646
      %v664 = vmul.f32 %v663, %v646
      %v665 = vmul.f32 %v543, %v543
      %v666 = vadd.f32 %v664, %v665
      %v667 = vrcp.pop %v666
      %v668 = vmul.f32 %v371, %v667
      %v669 = vsub.f32 0.0, %v654
      %v670 = vmul.f32 %v669, %v668
      %v671 = vmul.f32 %v653, %v668
      %v672 = vmul.f32 %v366, %v543
      %v673 = vsub.f32 0.0, %v369
      %v674 = vmul.f32 %v673, %v646
      %v675 = vmul.f32 %v658, %v670
      %v676 = vmul.f32 %v672, %v653
      %v677 = vadd.f32 %v675, %v676
      %v678 = vmul.f32 %v659, %v671
      %v679 = vadd.f32 %v677, %v678
      %v680 = vmul.f32 %v674, %v654
      %v681 = vadd.f32 %v679, %v680
      %v682 = vmul.f32 %v681, 0.5
      %v683 = vrcp.pop %v682
      %v684 = vmul.f32 %v662, %v683
      %v685 = vmax.f32 %v684, -0.030543262
      %v686 = vmin.f32 %v685, 0.030543262
      %v687 = vsub.f32 %v431, %v686
      %v688 = vand.u32 2147483647, %v662
      %v689 = vsel %vm428, %v688, 0.0
      %690 = vmax.xlane.f32.xlu0 %v689
      %v691 = vpop.xlane.xlu0 %690
      %v692 = vrot.slane %v691, 4
      %v693 = vmax.f32 %v691, %v692
      %v694 = vrot.slane %v693, 2
      %v695 = vmax.f32 %v693, %v694
      %v696 = vrot.slane %v695, 1
      %v697 = vmax.f32 %v695, %v696
      %s698 = vtos %v697
      %p699 = scmp.lt.f32.partialorder %s698, 0.0001
      %v700 = vand.u32 2147483647, %v686
      %v701 = vsel %vm428, %v700, 0.0
      %702 = vmax.xlane.f32.xlu0 %v701
      %v703 = vpop.xlane.xlu0 %702
      %v704 = vrot.slane %v703, 4
      %v705 = vmax.f32 %v703, %v704
      %v706 = vrot.slane %v705, 2
      %v707 = vmax.f32 %v705, %v706
      %v708 = vrot.slane %v707, 1
      %v709 = vmax.f32 %v707, %v708
      %s710 = vtos %v709
      %p711 = scmp.lt.f32.partialorder %s710, 0.0017453292
      %p712 = por %p699, %p711
      %s713 = scalar_select %p712, 1, 0
      %s714 = sadd.s32 %s430, 1
    $region66: #{tpu_custom_call.1} parent=1 // loop_footer
      _
    $region67: #{tpu_custom_call.1} parent=1 // loop_footer_branch
      %429 = sbr.rel target = $region63
    $region68: #{tpu_custom_call.1} parent=1 // loop_exit
      _
    %v715 = vand.u32 2147483647, %v431
    %vm716 = vcmp.le.f32.partialorder %v715, 0.7853982
    %vm717 = vcmp.lt.s32.totalorder %v431, 0
    %v718 = vand.u32 %v431, 2139095040
    %v719 = vshrl.u32 %v718, 23
    %v720 = vsub.s32 %v719, 127
    %v721 = vand.u32 2147483647, %v431
    %v722 = vand.u32 %v721, 8388607
    %v723 = vor.u32 %v722, 8388608
    %v724 = vsub.s32 0, %v723
    %v725 = vadd.s32 %v720, 1
    %vm726 = vcmp.gt.s32.totalorder %v725, 0
    %v727 = vsel %vm726, %v725, 0
    %v728 = vshrl.u32 %v727, 5
    %v729 = vand.u32 %v727, 31
    %v730 = vsub.s32 32, %v729
    %v731 = vshrl.u32 683565275, %v730
    %v732 = vshll.u32 683565275, %v729
    %v733 = vshrl.u32 2475754826, %v730
    %v734 = vor.u32 %v732, %v733
    %v735 = vshll.u32 2475754826, %v729
    %v736 = vshrl.u32 2131351028, %v730
    %v737 = vor.u32 %v735, %v736
    %v738 = vshll.u32 2131351028, %v729
    %v739 = vshrl.u32 2102212464, %v730
    %v740 = vor.u32 %v738, %v739
    %v741 = vshll.u32 2102212464, %v729
    %v742 = vshrl.u32 920167782, %v730
    %v743 = vor.u32 %v741, %v742
    %v744 = vshll.u32 920167782, %v729
    %v745 = vshrl.u32 1326507024, %v730
    %v746 = vor.u32 %v744, %v745
    %vm747 = vcmp.lt.s32.totalorder %v728, 1
    %vm748 = vcmp.lt.s32.totalorder %v728, 2
    %vm749 = vcmp.lt.s32.totalorder %v728, 3
    %vm750 = vcmp.lt.s32.totalorder %v728, 4
    %v751 = vsel %vm747, %v731, %v734
    %v752 = vsel %vm750, %v740, 2102212464
    %v753 = vsel %vm749, %v737, %v752
    %v754 = vsel %vm748, %v751, %v753
    %v755 = vsel %vm747, %v734, %v737
    %v756 = vsel %vm750, %v743, 920167782
    %v757 = vsel %vm749, %v740, %v756
    %v758 = vsel %vm748, %v755, %v757
    %v759 = vsel %vm747, %v737, %v740
    %v760 = vsel %vm750, %v746, 1326507024
    %v761 = vsel %vm749, %v743, %v760
    %v762 = vsel %vm748, %v759, %v761
    %v763 = vshll.u32 %v723, 8
    %v764 = vmul.u32.u64.compose %v763, %v762
    %v765 = vextract.low.u32 %v764
    %v766 = vextract.high.u32 %v764
    %v767 = vmul.u32.u64.compose %v763, %v758
    %v768 = vextract.low.u32 %v767
    %v769 = vextract.high.u32 %v767
    %v770 = vmul.u32 %v763, %v754
    %v771 = vadd.s32 %v766, %v768
    %vm772 = vc.u32 %v766, %v768
    %v773 = vadd.s32 %v769, 1
    %v774 = vsel %vm772, %v773, %v769
    %v775 = vadd.s32 %v770, %v774
    %v776 = vadd.s32 %v775, 536870912
    %v777 = vshrl.u32 %v776, 30
    %v778 = vshll.u32 %v777, 30
    %v779 = vsub.s32 %v775, %v778
    %vm780 = vcmp.lt.s32.totalorder %v779, 0
    %v781 = vsub.s32 0, %v779
    %v782 = vsel %vm780, %v781, %v779
    %v783 = vclz %v782
    %v784 = vsub.s32 %v783, 2
    %vm785 = vcmp.gt.s32.totalorder 0, %v784
    %v786 = vsel %vm785, 0, %v784
    %v787 = vsub.s32 32, %v786
    %v788 = vshll.u32 %v779, %v786
    %v789 = vshrl.u32 %v771, %v787
    %v790 = vor.u32 %v788, %v789
    %v791 = vsub.s32 4294967266, %v786
    %v792 = vadd.s32 %v791, 127
    %v793 = vshll.u32 %v792, 23
    %v794 = vor.u32 4788187, %v793
    %v795 = vand.u32 2147483647, %v794
    %v797 = vcvt.s32.f32 %v790
    %v798 = vmul.f32 %v797, %v795
    %v799 = vxor.u32 %v798, 2147483648
    %v800 = vsel %vm717, %v799, %v798
    %v801 = vsub.s32 4, %v777
    %v802 = vsel %vm717, %v801, %v777
    %v803 = vsel %vm716, %v431, %v800
    %v804 = vsel %vm716, 0, %v802
    %v805 = vcosq.f32.pop %v803
    %v806 = vsinq.f32.pop %v803
    %vm807 = vweird.f32 %v431
    %v808 = vadd.s32 %v804, 3
    %v809 = vand.u32 %v808, 3
    %vm810 = vcmp.lt.s32.totalorder %v809, 2
    %vm811 = vcmp.eq.s32.totalorder %v809, 0
    %v812 = vxor.u32 %v806, 2147483648
    %v813 = vsel %vm811, %v805, %v812
    %vm814 = vcmp.eq.s32.totalorder %v809, 2
    %v815 = vxor.u32 %v805, 2147483648
    %v816 = vsel %vm814, %v815, %v806
    %v817 = vsel %vm810, %v813, %v816
    %v818 = vsel %vm807, nan, %v817
    %v819 = vand.u32 2147483647, %v431
    %vm820 = vcmp.le.f32.partialorder %v819, 0.7853982
    %vm821 = vcmp.lt.s32.totalorder %v431, 0
    %v822 = vand.u32 %v431, 2139095040
    %v823 = vshrl.u32 %v822, 23
    %v824 = vsub.s32 %v823, 127
    %v825 = vand.u32 2147483647, %v431
    %v826 = vand.u32 %v825, 8388607
    %v827 = vor.u32 %v826, 8388608
    %v828 = vsub.s32 0, %v827
    %v829 = vadd.s32 %v824, 1
    %vm830 = vcmp.gt.s32.totalorder %v829, 0
    %v831 = vsel %vm830, %v829, 0
    %v832 = vshrl.u32 %v831, 5
    %v833 = vand.u32 %v831, 31
    %v834 = vsub.s32 32, %v833
    %v835 = vshrl.u32 683565275, %v834
    %v836 = vshll.u32 683565275, %v833
    %v837 = vshrl.u32 2475754826, %v834
    %v838 = vor.u32 %v836, %v837
    %v839 = vshll.u32 2475754826, %v833
    %v840 = vshrl.u32 2131351028, %v834
    %v841 = vor.u32 %v839, %v840
    %v842 = vshll.u32 2131351028, %v833
    %v843 = vshrl.u32 2102212464, %v834
    %v844 = vor.u32 %v842, %v843
    %v845 = vshll.u32 2102212464, %v833
    %v846 = vshrl.u32 920167782, %v834
    %v847 = vor.u32 %v845, %v846
    %v848 = vshll.u32 920167782, %v833
    %v849 = vshrl.u32 1326507024, %v834
    %v850 = vor.u32 %v848, %v849
    %vm851 = vcmp.lt.s32.totalorder %v832, 1
    %vm852 = vcmp.lt.s32.totalorder %v832, 2
    %vm853 = vcmp.lt.s32.totalorder %v832, 3
    %vm854 = vcmp.lt.s32.totalorder %v832, 4
    %v855 = vsel %vm851, %v835, %v838
    %v856 = vsel %vm854, %v844, 2102212464
    %v857 = vsel %vm853, %v841, %v856
    %v858 = vsel %vm852, %v855, %v857
    %v859 = vsel %vm851, %v838, %v841
    %v860 = vsel %vm854, %v847, 920167782
    %v861 = vsel %vm853, %v844, %v860
    %v862 = vsel %vm852, %v859, %v861
    %v863 = vsel %vm851, %v841, %v844
    %v864 = vsel %vm854, %v850, 1326507024
    %v865 = vsel %vm853, %v847, %v864
    %v866 = vsel %vm852, %v863, %v865
    %v867 = vshll.u32 %v827, 8
    %v868 = vmul.u32.u64.compose %v867, %v866
    %v869 = vextract.low.u32 %v868
    %v870 = vextract.high.u32 %v868
    %v871 = vmul.u32.u64.compose %v867, %v862
    %v872 = vextract.low.u32 %v871
    %v873 = vextract.high.u32 %v871
    %v874 = vmul.u32 %v867, %v858
    %v875 = vadd.s32 %v870, %v872
    %vm876 = vc.u32 %v870, %v872
    %v877 = vadd.s32 %v873, 1
    %v878 = vsel %vm876, %v877, %v873
    %v879 = vadd.s32 %v874, %v878
    %v880 = vadd.s32 %v879, 536870912
    %v881 = vshrl.u32 %v880, 30
    %v882 = vshll.u32 %v881, 30
    %v883 = vsub.s32 %v879, %v882
    %vm884 = vcmp.lt.s32.totalorder %v883, 0
    %v885 = vsub.s32 0, %v883
    %v886 = vsel %vm884, %v885, %v883
    %v887 = vclz %v886
    %v888 = vsub.s32 %v887, 2
    %vm889 = vcmp.gt.s32.totalorder 0, %v888
    %v890 = vsel %vm889, 0, %v888
    %v891 = vsub.s32 32, %v890
    %v892 = vshll.u32 %v883, %v890
    %v893 = vshrl.u32 %v875, %v891
    %v894 = vor.u32 %v892, %v893
    %v895 = vsub.s32 4294967266, %v890
    %v896 = vadd.s32 %v895, 127
    %v897 = vshll.u32 %v896, 23
    %v898 = vor.u32 4788187, %v897
    %v899 = vand.u32 2147483647, %v898
    %v901 = vcvt.s32.f32 %v894
    %v902 = vmul.f32 %v901, %v899
    %v903 = vxor.u32 %v902, 2147483648
    %v904 = vsel %vm821, %v903, %v902
    %v905 = vsub.s32 4, %v881
    %v906 = vsel %vm821, %v905, %v881
    %v907 = vsel %vm820, %v431, %v904
    %v908 = vsel %vm820, 0, %v906
    %v909 = vcosq.f32.pop %v907
    %v910 = vsinq.f32.pop %v907
    %vm911 = vweird.f32 %v431
    %v912 = vand.u32 %v908, 3
    %vm913 = vcmp.lt.s32.totalorder %v912, 2
    %vm914 = vcmp.eq.s32.totalorder %v912, 0
    %v915 = vxor.u32 %v910, 2147483648
    %v916 = vsel %vm914, %v909, %v915
    %vm917 = vcmp.eq.s32.totalorder %v912, 2
    %v918 = vxor.u32 %v909, 2147483648
    %v919 = vsel %vm917, %v918, %v910
    %v920 = vsel %vm913, %v916, %v919
    %v921 = vsel %vm911, nan, %v920
    %v922 = vsub.f32 0.0, %v371
    %v923 = vmul.f32 %v922, %v921
    %v924 = vrcp.pop %v818
    %v925 = vmul.f32 %v923, %v924
    %v926 = vmul.f32 %v925, %v925
    %v927 = vadd.f32 %v926, 1.0
    %v928 = vrsqrt.pop %v927
    %v929 = vmul.f32 %v925, %v928
    %v930 = vmul.f32 %v366, %v921
    %v931 = vmul.f32 %v369, %v818
    %v932 = vadd.f32 %v931, %v368
    %v933 = vand.u32 2147483647, %v432
    %vm934 = vcmp.le.f32.partialorder %v933, 0.7853982
    %vm935 = vcmp.lt.s32.totalorder %v432, 0
    %v936 = vand.u32 %v432, 2139095040
    %v937 = vshrl.u32 %v936, 23
    %v938 = vsub.s32 %v937, 127
    %v939 = vand.u32 2147483647, %v432
    %v940 = vand.u32 %v939, 8388607
    %v941 = vor.u32 %v940, 8388608
    %v942 = vsub.s32 0, %v941
    %v943 = vadd.s32 %v938, 1
    %vm944 = vcmp.gt.s32.totalorder %v943, 0
    %v945 = vsel %vm944, %v943, 0
    %v946 = vshrl.u32 %v945, 5
    %v947 = vand.u32 %v945, 31
    %v948 = vsub.s32 32, %v947
    %v949 = vshrl.u32 683565275, %v948
    %v950 = vshll.u32 683565275, %v947
    %v951 = vshrl.u32 2475754826, %v948
    %v952 = vor.u32 %v950, %v951
    %v953 = vshll.u32 2475754826, %v947
    %v954 = vshrl.u32 2131351028, %v948
    %v955 = vor.u32 %v953, %v954
    %v956 = vshll.u32 2131351028, %v947
    %v957 = vshrl.u32 2102212464, %v948
    %v958 = vor.u32 %v956, %v957
    %v959 = vshll.u32 2102212464, %v947
    %v960 = vshrl.u32 920167782, %v948
    %v961 = vor.u32 %v959, %v960
    %v962 = vshll.u32 920167782, %v947
    %v963 = vshrl.u32 1326507024, %v948
    %v964 = vor.u32 %v962, %v963
    %vm965 = vcmp.lt.s32.totalorder %v946, 1
    %vm966 = vcmp.lt.s32.totalorder %v946, 2
    %vm967 = vcmp.lt.s32.totalorder %v946, 3
    %vm968 = vcmp.lt.s32.totalorder %v946, 4
    %v969 = vsel %vm965, %v949, %v952
    %v970 = vsel %vm968, %v958, 2102212464
    %v971 = vsel %vm967, %v955, %v970
    %v972 = vsel %vm966, %v969, %v971
    %v973 = vsel %vm965, %v952, %v955
    %v974 = vsel %vm968, %v961, 920167782
    %v975 = vsel %vm967, %v958, %v974
    %v976 = vsel %vm966, %v973, %v975
    %v977 = vsel %vm965, %v955, %v958
    %v978 = vsel %vm968, %v964, 1326507024
    %v979 = vsel %vm967, %v961, %v978
    %v980 = vsel %vm966, %v977, %v979
    %v981 = vshll.u32 %v941, 8
    %v982 = vmul.u32.u64.compose %v981, %v980
    %v983 = vextract.low.u32 %v982
    %v984 = vextract.high.u32 %v982
    %v985 = vmul.u32.u64.compose %v981, %v976
    %v986 = vextract.low.u32 %v985
    %v987 = vextract.high.u32 %v985
    %v988 = vmul.u32 %v981, %v972
    %v989 = vadd.s32 %v984, %v986
    %vm990 = vc.u32 %v984, %v986
    %v991 = vadd.s32 %v987, 1
    %v992 = vsel %vm990, %v991, %v987
    %v993 = vadd.s32 %v988, %v992
    %v994 = vadd.s32 %v993, 536870912
    %v995 = vshrl.u32 %v994, 30
    %v996 = vshll.u32 %v995, 30
    %v997 = vsub.s32 %v993, %v996
    %vm998 = vcmp.lt.s32.totalorder %v997, 0
    %v999 = vsub.s32 0, %v997
    %v1000 = vsel %vm998, %v999, %v997
    %v1001 = vclz %v1000
    %v1002 = vsub.s32 %v1001, 2
    %vm1003 = vcmp.gt.s32.totalorder 0, %v1002
    %v1004 = vsel %vm1003, 0, %v1002
    %v1005 = vsub.s32 32, %v1004
    %v1006 = vshll.u32 %v997, %v1004
    %v1007 = vshrl.u32 %v989, %v1005
    %v1008 = vor.u32 %v1006, %v1007
    %v1009 = vsub.s32 4294967266, %v1004
    %v1010 = vadd.s32 %v1009, 127
    %v1011 = vshll.u32 %v1010, 23
    %v1012 = vor.u32 4788187, %v1011
    %v1013 = vand.u32 2147483647, %v1012
    %v1015 = vcvt.s32.f32 %v1008
    %v1016 = vmul.f32 %v1015, %v1013
    %v1017 = vxor.u32 %v1016, 2147483648
    %v1018 = vsel %vm935, %v1017, %v1016
    %v1019 = vsub.s32 4, %v995
    %v1020 = vsel %vm935, %v1019, %v995
    %v1021 = vsel %vm934, %v432, %v1018
    %v1022 = vsel %vm934, 0, %v1020
    %v1023 = vcosq.f32.pop %v1021
    %v1024 = vsinq.f32.pop %v1021
    %vm1025 = vweird.f32 %v432
    %v1026 = vand.u32 %v1022, 3
    %vm1027 = vcmp.lt.s32.totalorder %v1026, 2
    %vm1028 = vcmp.eq.s32.totalorder %v1026, 0
    %v1029 = vxor.u32 %v1024, 2147483648
    %v1030 = vsel %vm1028, %v1023, %v1029
    %vm1031 = vcmp.eq.s32.totalorder %v1026, 2
    %v1032 = vxor.u32 %v1023, 2147483648
    %v1033 = vsel %vm1031, %v1032, %v1024
    %v1034 = vsel %vm1027, %v1030, %v1033
    %v1035 = vsel %vm1025, nan, %v1034
    %v1036 = vmul.f32 %v366, %v1035
    %v1037 = vsub.f32 %v378, %v1036
    %v1038 = vand.u32 2147483647, %v432
    %vm1039 = vcmp.le.f32.partialorder %v1038, 0.7853982
    %vm1040 = vcmp.lt.s32.totalorder %v432, 0
    %v1041 = vand.u32 %v432, 2139095040
    %v1042 = vshrl.u32 %v1041, 23
    %v1043 = vsub.s32 %v1042, 127
    %v1044 = vand.u32 2147483647, %v432
    %v1045 = vand.u32 %v1044, 8388607
    %v1046 = vor.u32 %v1045, 8388608
    %v1047 = vsub.s32 0, %v1046
    %v1048 = vadd.s32 %v1043, 1
    %vm1049 = vcmp.gt.s32.totalorder %v1048, 0
    %v1050 = vsel %vm1049, %v1048, 0
    %v1051 = vshrl.u32 %v1050, 5
    %v1052 = vand.u32 %v1050, 31
    %v1053 = vsub.s32 32, %v1052
    %v1054 = vshrl.u32 683565275, %v1053
    %v1055 = vshll.u32 683565275, %v1052
    %v1056 = vshrl.u32 2475754826, %v1053
    %v1057 = vor.u32 %v1055, %v1056
    %v1058 = vshll.u32 2475754826, %v1052
    %v1059 = vshrl.u32 2131351028, %v1053
    %v1060 = vor.u32 %v1058, %v1059
    %v1061 = vshll.u32 2131351028, %v1052
    %v1062 = vshrl.u32 2102212464, %v1053
    %v1063 = vor.u32 %v1061, %v1062
    %v1064 = vshll.u32 2102212464, %v1052
    %v1065 = vshrl.u32 920167782, %v1053
    %v1066 = vor.u32 %v1064, %v1065
    %v1067 = vshll.u32 920167782, %v1052
    %v1068 = vshrl.u32 1326507024, %v1053
    %v1069 = vor.u32 %v1067, %v1068
    %vm1070 = vcmp.lt.s32.totalorder %v1051, 1
    %vm1071 = vcmp.lt.s32.totalorder %v1051, 2
    %vm1072 = vcmp.lt.s32.totalorder %v1051, 3
    %vm1073 = vcmp.lt.s32.totalorder %v1051, 4
    %v1074 = vsel %vm1070, %v1054, %v1057
    %v1075 = vsel %vm1073, %v1063, 2102212464
    %v1076 = vsel %vm1072, %v1060, %v1075
    %v1077 = vsel %vm1071, %v1074, %v1076
    %v1078 = vsel %vm1070, %v1057, %v1060
    %v1079 = vsel %vm1073, %v1066, 920167782
    %v1080 = vsel %vm1072, %v1063, %v1079
    %v1081 = vsel %vm1071, %v1078, %v1080
    %v1082 = vsel %vm1070, %v1060, %v1063
    %v1083 = vsel %vm1073, %v1069, 1326507024
    %v1084 = vsel %vm1072, %v1066, %v1083
    %v1085 = vsel %vm1071, %v1082, %v1084
    %v1086 = vshll.u32 %v1046, 8
    %v1087 = vmul.u32.u64.compose %v1086, %v1085
    %v1088 = vextract.low.u32 %v1087
    %v1089 = vextract.high.u32 %v1087
    %v1090 = vmul.u32.u64.compose %v1086, %v1081
    %v1091 = vextract.low.u32 %v1090
    %v1092 = vextract.high.u32 %v1090
    %v1093 = vmul.u32 %v1086, %v1077
    %v1094 = vadd.s32 %v1089, %v1091
    %vm1095 = vc.u32 %v1089, %v1091
    %v1096 = vadd.s32 %v1092, 1
    %v1097 = vsel %vm1095, %v1096, %v1092
    %v1098 = vadd.s32 %v1093, %v1097
    %v1099 = vadd.s32 %v1098, 536870912
    %v1100 = vshrl.u32 %v1099, 30
    %v1101 = vshll.u32 %v1100, 30
    %v1102 = vsub.s32 %v1098, %v1101
    %vm1103 = vcmp.lt.s32.totalorder %v1102, 0
    %v1104 = vsub.s32 0, %v1102
    %v1105 = vsel %vm1103, %v1104, %v1102
    %v1106 = vclz %v1105
    %v1107 = vsub.s32 %v1106, 2
    %vm1108 = vcmp.gt.s32.totalorder 0, %v1107
    %v1109 = vsel %vm1108, 0, %v1107
    %v1110 = vsub.s32 32, %v1109
    %v1111 = vshll.u32 %v1102, %v1109
    %v1112 = vshrl.u32 %v1094, %v1110
    %v1113 = vor.u32 %v1111, %v1112
    %v1114 = vsub.s32 4294967266, %v1109
    %v1115 = vadd.s32 %v1114, 127
    %v1116 = vshll.u32 %v1115, 23
    %v1117 = vor.u32 4788187, %v1116
    %v1118 = vand.u32 2147483647, %v1117
    %v1120 = vcvt.s32.f32 %v1113
    %v1121 = vmul.f32 %v1120, %v1118
    %v1122 = vxor.u32 %v1121, 2147483648
    %v1123 = vsel %vm1040, %v1122, %v1121
    %v1124 = vsub.s32 4, %v1100
    %v1125 = vsel %vm1040, %v1124, %v1100
    %v1126 = vsel %vm1039, %v432, %v1123
    %v1127 = vsel %vm1039, 0, %v1125
    %v1128 = vcosq.f32.pop %v1126
    %v1129 = vsinq.f32.pop %v1126
    %vm1130 = vweird.f32 %v432
    %v1131 = vadd.s32 %v1127, 3
    %v1132 = vand.u32 %v1131, 3
    %vm1133 = vcmp.lt.s32.totalorder %v1132, 2
    %vm1134 = vcmp.eq.s32.totalorder %v1132, 0
    %v1135 = vxor.u32 %v1129, 2147483648
    %v1136 = vsel %vm1134, %v1128, %v1135
    %vm1137 = vcmp.eq.s32.totalorder %v1132, 2
    %v1138 = vxor.u32 %v1128, 2147483648
    %v1139 = vsel %vm1137, %v1138, %v1129
    %v1140 = vsel %vm1133, %v1136, %v1139
    %v1141 = vsel %vm1130, nan, %v1140
    %v1142 = vmul.f32 %v369, %v1141
    %v1143 = vadd.f32 %v1142, %v368
    %v1144 = vsub.f32 %v375, %v1143
    %v1145 = vsub.f32 0.0, %v929
    %v1146 = vmul.f32 %v1145, %v930
    %v1147 = vsub.f32 %v932, %v368
    %v1148 = vmul.f32 %v928, %v1147
    %v1149 = vadd.f32 %v1146, %v1148
    %vm1150 = vcmp.gt.f32.partialorder %v1149, 0.0
    %v1151 = vsel %vm1150, 1.0, 0.0
    %vm1152 = vcmp.lt.f32.partialorder %v1149, 0.0
    %v1153 = vsel %vm1152, 1.0, 0.0
    %v1154 = vsub.f32 %v1151, %v1153
    %v1155 = vmul.f32 %v1145, %v1154
    %v1156 = vmul.f32 %v928, %v1154
    %v1157 = vmul.f32 %v1037, %v1155
    %v1158 = vmul.f32 %v1144, %v1156
    %v1159 = vadd.f32 %v1157, %v1158
    %v1160 = vmax.f32 %v1159, 0.0
    %v1161 = vmul.f32 %v1160, 0.40406102
    %v1162 = vmul.f32 %v1161, 0.3275911
    %v1163 = vadd.f32 %v1162, 1.0
    %v1164 = vrcp.pop %v1163
    %v1165 = vmul.f32 %v1164, 1.0614054
    %v1166 = vadd.f32 %v1165, -1.4531521
    %v1167 = vmul.f32 %v1164, %v1166
    %v1168 = vadd.f32 %v1167, 1.4214138
    %v1169 = vmul.f32 %v1164, %v1168
    %v1170 = vadd.f32 %v1169, -0.28449672
    %v1171 = vmul.f32 %v1164, %v1170
    %v1172 = vadd.f32 %v1171, 0.2548296
    %v1173 = vmul.f32 %v1164, %v1172
    %v1174 = vsub.f32 0.0, %v1161
    %v1175 = vmul.f32 %v1174, %v1161
    %v1176 = vmul.f32 %v1175, 1.442695
    %v1177 = vpow.pop %v1176
    %v1178 = vmul.f32 %v1173, %v1177
    %v1179 = vsub.f32 1.0, %v1178
    %v1180 = vld [vmem:[%s7] sm:$0xff]
    %1182 = vset.pattern.permute.xlu0 0
    %1183 = vperm.xlu0 %1182, %v1180
    %v1184 = vpop.permute.xlu0 %1183
    %v1186 = vmul.f32 %v1179, %v1184
    %v1187 = vrot.slane %v1186, 4
    %v1188 = vadd.f32 %v1186, %v1187
    %v1189 = vrot.slane %v1188, 2
    %v1190 = vadd.f32 %v1188, %v1189
    %v1191 = vrot.slane %v1190, 1
    %v1192 = vadd.f32 %v1190, %v1191
    %v1193 = vsub.f32 0.0, %v1192
    %v1194 = vmul.f32 %v1193, 1.442695
    %v1195 = vpow.pop %v1194
    %1196 = vst [vmem:[#allocation15] sm:$0xff] %v930
    %s1197 = scalar_lea.vmem [#allocation15], 8
    %1198 = vst [vmem:[%s1197] sm:$0xff] %v932
    %s1199 = scalar_lea.vmem [#allocation15], 16
    %1200 = vst [vmem:[%s1199] sm:$0xff] %v1155
    %s1201 = scalar_lea.vmem [#allocation15], 24
    %1202 = vst [vmem:[%s1201] sm:$0xff] %v1156
    %s1203 = scalar_lea.vmem [#allocation15], 32
    %1204 = vst [vmem:[%s1203] sm:$0xff] %v368
    %s1205 = scalar_lea.vmem [#allocation15], 40
    %1206 = vst [vmem:[%s1205] sm:$0xff] %v366
    %s1207 = scalar_lea.vmem [#allocation15], 48
    %1208 = vst [vmem:[%s1207] sm:$0xff] %v369
    %s1209 = scalar_lea.vmem [#allocation15], 56
    %1210 = vst [vmem:[%s1209] sm:$0xff] %v1159
    %s1211 = scalar_lea.vmem [#allocation15], 64
    %1212 = vst [vmem:[%s1211] sm:$0xff] %v1179
    %1213 = vst [vmem:[#allocation16] sm:$0x1] %v1195
    // Predicated region
    $region69: #{tpu_custom_call.1} parent=1 // pred_check
      _
    $region70: #{tpu_custom_call.1} parent=1 // pred_check_branch
      %1215 = sbr.rel (0) target = $region72
    $region71: #{tpu_custom_call.1} parent=1 // pred_region
      %s1217 = ssub.s32 1152, 1152
      %1218 = vsyncadd [#allocation4], %s1217
      %s1219 = sshll.u32 [#allocation15], 4
      %s1220 = int_to_ptr.vmem [resolvable:$true] %s1219
      %1225 = dma.vmem_to_hbm [thread:$0]  %s1220, 1152, %s8, [#allocation4], 128, 128, 8
    $region72: #{tpu_custom_call.1} parent=1 // pred_fallthru
      _
    // Predicated region
    $region73: #{tpu_custom_call.1} parent=1 // pred_check
      _
    $region74: #{tpu_custom_call.1} parent=1 // pred_check_branch
      %1227 = sbr.rel (0) target = $region76
    $region75: #{tpu_custom_call.1} parent=1 // pred_region
      %s1229 = ssub.s32 16, 16
      %1230 = vsyncadd [#allocation17], %s1229
      %s1232 = sshll.u32 [#allocation16], 4
      %s1233 = int_to_ptr.vmem [resolvable:$true] %s1232
      %1235 = dma.vmem_to_hbm [thread:$0]  %s1233, 16, %s9, [#allocation17]
    $region76: #{tpu_custom_call.1} parent=1 // pred_fallthru
      _
    // Predicated region
    $region77: #{tpu_custom_call.1} parent=1 // pred_check
      _
    $region78: #{tpu_custom_call.1} parent=1 // pred_check_branch
      %1237 = sbr.rel (0) target = $region80
    $region79: #{tpu_custom_call.1} parent=1 // pred_region
      %1238 = dma.done [#allocation4], 1152
    $region80: #{tpu_custom_call.1} parent=1 // pred_fallthru
      _
    // Predicated region
    $region81: #{tpu_custom_call.1} parent=1 // pred_check
      _
    $region82: #{tpu_custom_call.1} parent=1 // pred_check_branch
      %1240 = sbr.rel (0) target = $region84
    $region83: #{tpu_custom_call.1} parent=1 // pred_region
      %1241 = dma.done [#allocation17], 16
    $region84: #{tpu_custom_call.1} parent=1 // pred_fallthru
      _
    %1242 = vsyncpa [#allocation3], 1
    %1243 = vsyncpa [#allocation4], 1
    %1244 = vsyncpa [#allocation17], 1
    %1245 = vsyncpa [#allocation5], 1
    %1246 = vsyncpa [#allocation8], 1
    %1247 = vsyncpa [#allocation11], 1
    %1248 = vsyncpa [#allocation14], 1

</llo_original>
